<compile_context>
chip_gen: v7x
topology: tpu7x:2x2x1
jax: 0.10.0
libtpu: 0.0.40
codegen_flags: <defaults>
</compile_context>

<pallas_src>
import functools

import jax
import jax.numpy as jnp
from jax.experimental import pallas as pl
from jax.experimental.pallas import tpu as pltpu


def _round_up(n, m):
    return ((n + m - 1) // m) * m


# ---------------------------------------------------------------------------
# Fused kernel: DBlock(enc layer2) -> sample z2 -> DBlock(enc layer1 over
# [b, z2]) -> sample z1 -> Decoder([z1, z2]) -> probabilities.
# Concatenated inputs are handled by splitting weights along K; sibling
# outputs (tanh/sigmoid gates, mu/logsigma) are fused along N.
# ---------------------------------------------------------------------------
def _tdvae_fused_kernel(
    # data (row tiles)
    b_ref, eps_ref,
    # encoder_b_to_z_layer2: fused [w1|w2] -> (B, 2*DH), [wmu|wls] -> (DH, 2*Z)
    e2_w12, e2_b12, e2_wml, e2_bml,
    # encoder_b_to_z_layer1 over concat(b, z2): K split into b/z parts,
    # outputs fused the same way
    e1_w12b, e1_w12z, e1_b12, e1_wml, e1_bml,
    # decoder (fc1 input = concat(z1, z2) -> K split into z1/z2 parts)
    d_w1a, d_w1b, d_b1, d_w2, d_b2, d_w3, d_b3,
    # output
    out_ref,
):
    f32 = jnp.float32
    bf16 = jnp.bfloat16
    DH = e2_w12.shape[1] // 2       # padded d_block hidden size (static)
    Z = e2_wml.shape[1] // 2        # padded z size (static)

    def mm(x_bf, w_ref):
        # bf16 MXU matmul, f32 accumulation (LHS already bf16).
        return jnp.dot(x_bf, w_ref[...], preferred_element_type=f32)

    def sigmoid(x):
        # single EUP op (tanh) + cheap VPU mul/add; exact sigmoid identity.
        return 0.5 * (jnp.tanh(0.5 * x) + 1.0)

    b_bf = b_ref[...]               # bf16, cast once on the host
    eps = eps_ref[...]              # f32; [eps2 | eps1] packed along lanes
    eps2 = eps[:, :Z]
    eps1 = eps[:, Z:]

    # --- encoder_b_to_z_layer2 (DBlock) + reparameterized sample -----------
    tg2 = mm(b_bf, e2_w12) + e2_b12[...]                  # one N=2*DH matmul
    h2 = jnp.tanh(tg2[:, :DH]) * sigmoid(tg2[:, DH:])
    ml2 = mm(h2.astype(bf16), e2_wml) + e2_bml[...]       # [mu2 | logsigma2]
    z2 = ml2[:, :Z] + jnp.exp(ml2[:, Z:]) * eps2
    z2_bf = z2.astype(bf16)

    # --- encoder_b_to_z_layer1 (DBlock over concat(b, z2), split weights) --
    tg1 = mm(b_bf, e1_w12b) + mm(z2_bf, e1_w12z) + e1_b12[...]
    h1 = jnp.tanh(tg1[:, :DH]) * sigmoid(tg1[:, DH:])
    ml1 = mm(h1.astype(bf16), e1_wml) + e1_bml[...]       # [mu1 | logsigma1]
    z1 = ml1[:, :Z] + jnp.exp(ml1[:, Z:]) * eps1
    z1_bf = z1.astype(bf16)

    # --- decoder: tanh, tanh, sigmoid over concat(z1, z2) ------------------
    # TODO(synk): optionally fuse fc1 along K (lane-concat z1|z2 -> one
    #             (2Z, DE) matmul) on v6e/v7x; marginal, costs a lane copy.
    d = jnp.tanh(mm(z1_bf, d_w1a) + mm(z2_bf, d_w1b) + d_b1[...])
    d = jnp.tanh(mm(d.astype(bf16), d_w2) + d_b2[...])
    p = sigmoid(mm(d.astype(bf16), d_w3) + d_b3[...])

    out_ref[...] = p.astype(out_ref.dtype)


# ---------------------------------------------------------------------------
# Parameter construction / padding
# ---------------------------------------------------------------------------
def init_tdvae_params(key, b_size, z_size, d_hidden, dec_hidden, x_size):
    """Unpadded f32 params matching the PyTorch module (weights transposed)."""
    keys = jax.random.split(key, 22)
    it = iter(keys)

    def linear(fan_in, fan_out):
        bound = fan_in ** -0.5
        w = jax.random.uniform(next(it), (fan_in, fan_out), jnp.float32, -bound, bound)
        b = jax.random.uniform(next(it), (fan_out,), jnp.float32, -bound, bound)
        return w, b

    def dblock(in_size):
        w1, b1 = linear(in_size, d_hidden)
        w2, b2 = linear(in_size, d_hidden)
        wmu, bmu = linear(d_hidden, z_size)
        wls, bls = linear(d_hidden, z_size)
        return dict(w1=w1, b1=b1, w2=w2, b2=b2, wmu=wmu, bmu=bmu, wls=wls, bls=bls)

    enc2 = dblock(b_size)
    enc1 = dblock(b_size + z_size)
    dw1, db1 = linear(2 * z_size, dec_hidden)
    dw2, db2 = linear(dec_hidden, dec_hidden)
    dw3, db3 = linear(dec_hidden, x_size)
    dec = dict(w1=dw1, b1=db1, w2=dw2, b2=db2, w3=dw3, b3=db3)
    return dict(enc2=enc2, enc1=enc1, dec=dec)


def pad_params(params, b_size, z_size, d_hidden, dec_hidden, x_size):
    """Zero-pad every feature dim to a multiple of 128; split concat inputs
    along K; fuse sibling outputs (w1|w2, wmu|wls) along N; weights -> bf16."""
    B, Z, DH, DE, X = (_round_up(n, 128) for n in
                       (b_size, z_size, d_hidden, dec_hidden, x_size))
    e2, e1, de = params["enc2"], params["enc1"], params["dec"]

    def pw(w, ip, op):
        return jnp.zeros((ip, op), jnp.float32).at[: w.shape[0], : w.shape[1]].set(w)

    def pb(b, op):
        return jnp.zeros((1, op), jnp.float32).at[0, : b.shape[0]].set(b)

    def fw(*pieces):        # fuse weights along the output (N) dim; bf16
        return jnp.concatenate([pw(w, ip, op) for w, ip, op in pieces],
                               axis=-1).astype(jnp.bfloat16)

    def fb(*pieces):        # fuse biases along the output dim; stays f32
        return jnp.concatenate([pb(b, op) for b, op in pieces], axis=-1)

    flat = (
        # encoder layer2: [w1|w2], [wmu|wls]
        fw((e2["w1"], B, DH), (e2["w2"], B, DH)),
        fb((e2["b1"], DH), (e2["b2"], DH)),
        fw((e2["wmu"], DH, Z), (e2["wls"], DH, Z)),
        fb((e2["bmu"], Z), (e2["bls"], Z)),
        # encoder layer1: input = concat(b, z2) -> split K; outputs fused
        fw((e1["w1"][:b_size], B, DH), (e1["w2"][:b_size], B, DH)),
        fw((e1["w1"][b_size:], Z, DH), (e1["w2"][b_size:], Z, DH)),
        fb((e1["b1"], DH), (e1["b2"], DH)),
        fw((e1["wmu"], DH, Z), (e1["wls"], DH, Z)),
        fb((e1["bmu"], Z), (e1["bls"], Z)),
        # decoder (fc1 input = concat(z1, z2) -> split K)
        pw(de["w1"][:z_size], Z, DE).astype(jnp.bfloat16),
        pw(de["w1"][z_size:], Z, DE).astype(jnp.bfloat16),
        pb(de["b1"], DE),
        pw(de["w2"], DE, DE).astype(jnp.bfloat16),
        pb(de["b2"], DE),
        pw(de["w3"], DE, X).astype(jnp.bfloat16),
        pb(de["b3"], X),
    )
    return flat, (B, Z, DH, DE, X)


# ---------------------------------------------------------------------------
# Wrapper: fold timesteps into the batch dim, pad, tile rows, call the kernel
# ---------------------------------------------------------------------------
def tdvae_reconstruct(b_seq, eps2, eps1, flat_params, sizes, pads, *, tm=512):
    """b_seq: (batch, T, b_size) belief states; eps*: (batch, T, z_size).
    Returns decoded probabilities of shape (batch, T, x_size)."""
    b_size, z_size, d_hidden, dec_hidden, x_size = sizes
    B_pad, Z_pad, DH, DE, X_pad = pads
    batch, T, _ = b_seq.shape
    rows = batch * T                       # fold timesteps into the batch dim

    # Row tile: multiple of 16 (bf16 sublane packing).  Clamp so the grid has
    # at least 2 steps whenever there are enough rows, so
    # dimension_semantics=("parallel",) can shard rows across v7x's 2 TCs.
    tm = min(tm, _round_up(rows, 16))
    if rows > 16:
        tm = min(tm, _round_up(-(-rows // 2), 16))
    tm = max(tm, 16)
    rows_pad = _round_up(rows, tm)

    def fold_pad(x, feat_pad, dtype):
        x = x.reshape(rows, x.shape[-1]).astype(jnp.float32)
        x = jnp.pad(x, ((0, rows_pad - rows), (0, feat_pad - x.shape[-1])))
        return x.astype(dtype)

    # Belief input is only ever a bf16 matmul LHS -> ship it bf16 (half DMA).
    b2d = fold_pad(b_seq, B_pad, jnp.bfloat16)
    # eps2 | eps1 merged into one lane-packed f32 input (single DMA stream).
    eps = jnp.concatenate([fold_pad(eps2, Z_pad, jnp.float32),
                           fold_pad(eps1, Z_pad, jnp.float32)], axis=-1)

    grid = (rows_pad // tm,)

    def data_spec(feat):
        return pl.BlockSpec((tm, feat), lambda i: (i, 0))

    def resident(arr):                     # weights/biases stay in VMEM
        # TODO(synk): pipeline_mode=pl.Buffered(1) to drop the pointless
        #             double-buffer on these constant blocks (minor VMEM win).
        return pl.BlockSpec(arr.shape, lambda i: (0, 0))

    flops = 2 * rows_pad * (
        B_pad * 2 * DH + DH * 2 * Z_pad                   # encoder layer2
        + (B_pad + Z_pad) * 2 * DH + DH * 2 * Z_pad       # encoder layer1
        + 2 * Z_pad * DE + DE * DE + DE * X_pad)          # decoder
    transcendentals = rows_pad * (4 * DH + 2 * Z_pad + 2 * DE + X_pad)
    bytes_accessed = (b2d.size * 2 + eps.size * 4 + rows_pad * X_pad * 4
                      + sum(int(p.size) * p.dtype.itemsize for p in flat_params))

    out = pl.pallas_call(
        _tdvae_fused_kernel,
        out_shape=jax.ShapeDtypeStruct((rows_pad, X_pad), jnp.float32),
        grid_spec=pltpu.PrefetchScalarGridSpec(
            num_scalar_prefetch=0,
            grid=grid,
            in_specs=[data_spec(B_pad), data_spec(2 * Z_pad)]
                     + [resident(p) for p in flat_params],
            out_specs=data_spec(X_pad),
        ),
        compiler_params=pltpu.CompilerParams(
            dimension_semantics=("parallel",),          # shards rows on v7x 2xTC
            vmem_limit_bytes=32 * 1024 * 1024,
        ),
        cost_estimate=pl.CostEstimate(
            flops=int(flops),
            transcendentals=int(transcendentals),
            bytes_accessed=int(bytes_accessed),
        ),
    )(b2d, eps, *flat_params)

    return out[:rows, :x_size].reshape(batch, T, x_size)


# ---------------------------------------------------------------------------
# Pure-JAX reference (mirrors the PyTorch math; matmul_dtype selects either
# full-f32 or a precision-matched bf16-matmul variant).
# ---------------------------------------------------------------------------
def reference(b_seq, eps2, eps1, params, *, matmul_dtype=jnp.float32):
    def mm(x, w):
        return jnp.dot(x.astype(matmul_dtype), w.astype(matmul_dtype),
                       preferred_element_type=jnp.float32)

    def dblock(x, p):
        h = jnp.tanh(mm(x, p["w1"]) + p["b1"]) * jax.nn.sigmoid(mm(x, p["w2"]) + p["b2"])
        return mm(h, p["wmu"]) + p["bmu"], mm(h, p["wls"]) + p["bls"]

    b2d = b_seq.reshape(-1, b_seq.shape[-1]).astype(jnp.float32)
    e2 = eps2.reshape(-1, eps2.shape[-1]).astype(jnp.float32)
    e1 = eps1.reshape(-1, eps1.shape[-1]).astype(jnp.float32)

    mu2, ls2 = dblock(b2d, params["enc2"])
    z2 = mu2 + jnp.exp(ls2) * e2
    mu1, ls1 = dblock(jnp.concatenate([b2d, z2], axis=-1), params["enc1"])
    z1 = mu1 + jnp.exp(ls1) * e1
    z = jnp.concatenate([z1, z2], axis=-1)

    d = params["dec"]
    h = jnp.tanh(mm(z, d["w1"]) + d["b1"])
    h = jnp.tanh(mm(h, d["w2"]) + d["b2"])
    p = jax.nn.sigmoid(mm(h, d["w3"]) + d["b3"])
    return p.reshape(b_seq.shape[0], b_seq.shape[1], -1)


if __name__ == "__main__":
    # Small TD-VAE-ish sizes (deliberately NOT multiples of 128 to exercise
    # the padding path): b_size=50, z_size=8, dblock_hidden=64,
    # decoder_hidden=200, x_size=196; batch=4, seq=16.
    batch, T = 4, 16
    b_size, z_size = 50, 8
    d_block_hidden, decoder_hidden, x_size = 64, 200, 196
    sizes = (b_size, z_size, d_block_hidden, decoder_hidden, x_size)

    key = jax.random.PRNGKey(0)
    kp, kb, k2, k1 = jax.random.split(key, 4)
    params = init_tdvae_params(kp, *sizes)
    b_seq = jax.random.normal(kb, (batch, T, b_size), jnp.float32)   # belief states
    eps2 = jax.random.normal(k2, (batch, T, z_size), jnp.float32)
    eps1 = jax.random.normal(k1, (batch, T, z_size), jnp.float32)

    flat_params, pads = pad_params(params, *sizes)

    # Default tm=512 auto-clamps to a 2-step grid (64 rows -> tm=32), so the
    # tiny demo still exercises a multi-step, dual-core-shardable grid.
    fn = jax.jit(functools.partial(tdvae_reconstruct, sizes=sizes, pads=pads))
    out = jax.block_until_ready(fn(b_seq, eps2, eps1, flat_params))

    assert out.shape == (batch, T, x_size)
    assert bool(jnp.all((out >= 0.0) & (out <= 1.0)))

    # Tight check against a precision-matched (bf16-matmul) reference, and a
    # looser check against the full-f32 reference (bf16 weight quantization).
    ref_bf16 = reference(b_seq, eps2, eps1, params, matmul_dtype=jnp.bfloat16)
    ref_f32 = reference(b_seq, eps2, eps1, params, matmul_dtype=jnp.float32)
    assert jnp.allclose(out, ref_bf16, atol=1e-2, rtol=1e-2), (
        "mismatch vs bf16-matched reference: "
        f"{float(jnp.max(jnp.abs(out - ref_bf16)))}")
    assert jnp.allclose(out, ref_f32, atol=6e-2, rtol=6e-2), (
        "mismatch vs f32 reference: "
        f"{float(jnp.max(jnp.abs(out - ref_f32)))}")

    print("KERNEL_OK")
</pallas_src>

<mosaic_0001>
module attributes {stable_mosaic.version = 11 : i64} {
  func.func @_tdvae_fused_kernel(%arg0: i32, %arg1: memref<32x128xbf16, #tpu.memory_space<vmem>>, %arg2: memref<32x256xf32, #tpu.memory_space<vmem>>, %arg3: memref<128x256xbf16, #tpu.memory_space<vmem>>, %arg4: memref<1x256xf32, #tpu.memory_space<vmem>>, %arg5: memref<128x256xbf16, #tpu.memory_space<vmem>>, %arg6: memref<1x256xf32, #tpu.memory_space<vmem>>, %arg7: memref<128x256xbf16, #tpu.memory_space<vmem>>, %arg8: memref<128x256xbf16, #tpu.memory_space<vmem>>, %arg9: memref<1x256xf32, #tpu.memory_space<vmem>>, %arg10: memref<128x256xbf16, #tpu.memory_space<vmem>>, %arg11: memref<1x256xf32, #tpu.memory_space<vmem>>, %arg12: memref<128x256xbf16, #tpu.memory_space<vmem>>, %arg13: memref<128x256xbf16, #tpu.memory_space<vmem>>, %arg14: memref<1x256xf32, #tpu.memory_space<vmem>>, %arg15: memref<256x256xbf16, #tpu.memory_space<vmem>>, %arg16: memref<1x256xf32, #tpu.memory_space<vmem>>, %arg17: memref<256x256xbf16, #tpu.memory_space<vmem>>, %arg18: memref<1x256xf32, #tpu.memory_space<vmem>>, %arg19: memref<32x256xf32, #tpu.memory_space<vmem>>) attributes {dimension_semantics = [#tpu.dimension_semantics<parallel>], iteration_bounds = array<i64: 2>, scalar_prefetch = 0 : i64, scratch_operands = 0 : i64, tpu.core_type = #tpu.core_type<tc>, window_params = [{transform_indices = @transform_0, window_bounds = array<i64: 32, 128>}, {transform_indices = @transform_1, window_bounds = array<i64: 32, 256>}, {pipeline_mode = #tpu.pipeline_mode<synchronous>, transform_indices = @transform_2, window_bounds = array<i64: 128, 256>}, {pipeline_mode = #tpu.pipeline_mode<synchronous>, transform_indices = @transform_3, window_bounds = array<i64: 1, 256>}, {pipeline_mode = #tpu.pipeline_mode<synchronous>, transform_indices = @transform_4, window_bounds = array<i64: 128, 256>}, {pipeline_mode = #tpu.pipeline_mode<synchronous>, transform_indices = @transform_5, window_bounds = array<i64: 1, 256>}, {pipeline_mode = #tpu.pipeline_mode<synchronous>, transform_indices = @transform_6, window_bounds = array<i64: 128, 256>}, {pipeline_mode = #tpu.pipeline_mode<synchronous>, transform_indices = @transform_7, window_bounds = array<i64: 128, 256>}, {pipeline_mode = #tpu.pipeline_mode<synchronous>, transform_indices = @transform_8, window_bounds = array<i64: 1, 256>}, {pipeline_mode = #tpu.pipeline_mode<synchronous>, transform_indices = @transform_9, window_bounds = array<i64: 128, 256>}, {pipeline_mode = #tpu.pipeline_mode<synchronous>, transform_indices = @transform_10, window_bounds = array<i64: 1, 256>}, {pipeline_mode = #tpu.pipeline_mode<synchronous>, transform_indices = @transform_11, window_bounds = array<i64: 128, 256>}, {pipeline_mode = #tpu.pipeline_mode<synchronous>, transform_indices = @transform_12, window_bounds = array<i64: 128, 256>}, {pipeline_mode = #tpu.pipeline_mode<synchronous>, transform_indices = @transform_13, window_bounds = array<i64: 1, 256>}, {pipeline_mode = #tpu.pipeline_mode<synchronous>, transform_indices = @transform_14, window_bounds = array<i64: 256, 256>}, {pipeline_mode = #tpu.pipeline_mode<synchronous>, transform_indices = @transform_15, window_bounds = array<i64: 1, 256>}, {pipeline_mode = #tpu.pipeline_mode<synchronous>, transform_indices = @transform_16, window_bounds = array<i64: 256, 256>}, {pipeline_mode = #tpu.pipeline_mode<synchronous>, transform_indices = @transform_17, window_bounds = array<i64: 1, 256>}, {transform_indices = @transform_18, window_bounds = array<i64: 32, 256>}]} {
    %c0 = arith.constant 0 : index
    %c0_0 = arith.constant 0 : index
    %0 = vector.load %arg1[%c0, %c0_0] : memref<32x128xbf16, #tpu.memory_space<vmem>>, vector<32x128xbf16>
    %c0_1 = arith.constant 0 : index
    %c0_2 = arith.constant 0 : index
    %1 = vector.load %arg2[%c0_1, %c0_2] : memref<32x256xf32, #tpu.memory_space<vmem>>, vector<32x256xf32>
    %2 = vector.extract_strided_slice %1 {offsets = [0, 0], sizes = [32, 128], strides = [1, 1]} : vector<32x256xf32> to vector<32x128xf32>
    %3 = vector.extract_strided_slice %1 {offsets = [0, 128], sizes = [32, 128], strides = [1, 1]} : vector<32x256xf32> to vector<32x128xf32>
    %c0_3 = arith.constant 0 : index
    %c0_4 = arith.constant 0 : index
    %4 = vector.load %arg3[%c0_3, %c0_4] : memref<128x256xbf16, #tpu.memory_space<vmem>>, vector<128x256xbf16>
    %cst = arith.constant dense<0.000000e+00> : vector<32x256xf32>
    %5 = tpu.matmul %0, %4, %cst {dimension_numbers = #tpu.dot_dimension_numbers<[1], [0], [0], [1], [0, 0, 1, 1], [], []>} : vector<32x128xbf16>, vector<128x256xbf16>, vector<32x256xf32> -> vector<32x256xf32>
    %c0_5 = arith.constant 0 : index
    %c0_6 = arith.constant 0 : index
    %6 = vector.load %arg4[%c0_5, %c0_6] : memref<1x256xf32, #tpu.memory_space<vmem>>, vector<1x256xf32>
    %7 = vector.broadcast %6 : vector<1x256xf32> to vector<32x256xf32>
    %8 = arith.addf %5, %7 : vector<32x256xf32>
    %9 = vector.extract_strided_slice %8 {offsets = [0, 0], sizes = [32, 128], strides = [1, 1]} : vector<32x256xf32> to vector<32x128xf32>
    %10 = math.tanh %9 : vector<32x128xf32>
    %11 = vector.extract_strided_slice %8 {offsets = [0, 128], sizes = [32, 128], strides = [1, 1]} : vector<32x256xf32> to vector<32x128xf32>
    %cst_7 = arith.constant 5.000000e-01 : f32
    %12 = vector.broadcast %cst_7 : f32 to vector<32x128xf32>
    %13 = arith.mulf %12, %11 : vector<32x128xf32>
    %14 = math.tanh %13 : vector<32x128xf32>
    %cst_8 = arith.constant 1.000000e+00 : f32
    %15 = vector.broadcast %cst_8 : f32 to vector<32x128xf32>
    %16 = arith.addf %14, %15 : vector<32x128xf32>
    %cst_9 = arith.constant 5.000000e-01 : f32
    %17 = vector.broadcast %cst_9 : f32 to vector<32x128xf32>
    %18 = arith.mulf %17, %16 : vector<32x128xf32>
    %19 = arith.mulf %10, %18 : vector<32x128xf32>
    %20 = arith.truncf %19 : vector<32x128xf32> to vector<32x128xbf16>
    %c0_10 = arith.constant 0 : index
    %c0_11 = arith.constant 0 : index
    %21 = vector.load %arg5[%c0_10, %c0_11] : memref<128x256xbf16, #tpu.memory_space<vmem>>, vector<128x256xbf16>
    %cst_12 = arith.constant dense<0.000000e+00> : vector<32x256xf32>
    %22 = tpu.matmul %20, %21, %cst_12 {dimension_numbers = #tpu.dot_dimension_numbers<[1], [0], [0], [1], [0, 0, 1, 1], [], []>} : vector<32x128xbf16>, vector<128x256xbf16>, vector<32x256xf32> -> vector<32x256xf32>
    %c0_13 = arith.constant 0 : index
    %c0_14 = arith.constant 0 : index
    %23 = vector.load %arg6[%c0_13, %c0_14] : memref<1x256xf32, #tpu.memory_space<vmem>>, vector<1x256xf32>
    %24 = vector.broadcast %23 : vector<1x256xf32> to vector<32x256xf32>
    %25 = arith.addf %22, %24 : vector<32x256xf32>
    %26 = vector.extract_strided_slice %25 {offsets = [0, 0], sizes = [32, 128], strides = [1, 1]} : vector<32x256xf32> to vector<32x128xf32>
    %27 = vector.extract_strided_slice %25 {offsets = [0, 128], sizes = [32, 128], strides = [1, 1]} : vector<32x256xf32> to vector<32x128xf32>
    %28 = math.exp %27 : vector<32x128xf32>
    %29 = arith.mulf %28, %2 : vector<32x128xf32>
    %30 = arith.addf %26, %29 : vector<32x128xf32>
    %31 = arith.truncf %30 : vector<32x128xf32> to vector<32x128xbf16>
    %c0_15 = arith.constant 0 : index
    %c0_16 = arith.constant 0 : index
    %32 = vector.load %arg7[%c0_15, %c0_16] : memref<128x256xbf16, #tpu.memory_space<vmem>>, vector<128x256xbf16>
    %cst_17 = arith.constant dense<0.000000e+00> : vector<32x256xf32>
    %33 = tpu.matmul %0, %32, %cst_17 {dimension_numbers = #tpu.dot_dimension_numbers<[1], [0], [0], [1], [0, 0, 1, 1], [], []>} : vector<32x128xbf16>, vector<128x256xbf16>, vector<32x256xf32> -> vector<32x256xf32>
    %c0_18 = arith.constant 0 : index
    %c0_19 = arith.constant 0 : index
    %34 = vector.load %arg8[%c0_18, %c0_19] : memref<128x256xbf16, #tpu.memory_space<vmem>>, vector<128x256xbf16>
    %cst_20 = arith.constant dense<0.000000e+00> : vector<32x256xf32>
    %35 = tpu.matmul %31, %34, %cst_20 {dimension_numbers = #tpu.dot_dimension_numbers<[1], [0], [0], [1], [0, 0, 1, 1], [], []>} : vector<32x128xbf16>, vector<128x256xbf16>, vector<32x256xf32> -> vector<32x256xf32>
    %36 = arith.addf %33, %35 : vector<32x256xf32>
    %c0_21 = arith.constant 0 : index
    %c0_22 = arith.constant 0 : index
    %37 = vector.load %arg9[%c0_21, %c0_22] : memref<1x256xf32, #tpu.memory_space<vmem>>, vector<1x256xf32>
    %38 = vector.broadcast %37 : vector<1x256xf32> to vector<32x256xf32>
    %39 = arith.addf %36, %38 : vector<32x256xf32>
    %40 = vector.extract_strided_slice %39 {offsets = [0, 0], sizes = [32, 128], strides = [1, 1]} : vector<32x256xf32> to vector<32x128xf32>
    %41 = math.tanh %40 : vector<32x128xf32>
    %42 = vector.extract_strided_slice %39 {offsets = [0, 128], sizes = [32, 128], strides = [1, 1]} : vector<32x256xf32> to vector<32x128xf32>
    %cst_23 = arith.constant 5.000000e-01 : f32
    %43 = vector.broadcast %cst_23 : f32 to vector<32x128xf32>
    %44 = arith.mulf %43, %42 : vector<32x128xf32>
    %45 = math.tanh %44 : vector<32x128xf32>
    %cst_24 = arith.constant 1.000000e+00 : f32
    %46 = vector.broadcast %cst_24 : f32 to vector<32x128xf32>
    %47 = arith.addf %45, %46 : vector<32x128xf32>
    %cst_25 = arith.constant 5.000000e-01 : f32
    %48 = vector.broadcast %cst_25 : f32 to vector<32x128xf32>
    %49 = arith.mulf %48, %47 : vector<32x128xf32>
    %50 = arith.mulf %41, %49 : vector<32x128xf32>
    %51 = arith.truncf %50 : vector<32x128xf32> to vector<32x128xbf16>
    %c0_26 = arith.constant 0 : index
    %c0_27 = arith.constant 0 : index
    %52 = vector.load %arg10[%c0_26, %c0_27] : memref<128x256xbf16, #tpu.memory_space<vmem>>, vector<128x256xbf16>
    %cst_28 = arith.constant dense<0.000000e+00> : vector<32x256xf32>
    %53 = tpu.matmul %51, %52, %cst_28 {dimension_numbers = #tpu.dot_dimension_numbers<[1], [0], [0], [1], [0, 0, 1, 1], [], []>} : vector<32x128xbf16>, vector<128x256xbf16>, vector<32x256xf32> -> vector<32x256xf32>
    %c0_29 = arith.constant 0 : index
    %c0_30 = arith.constant 0 : index
    %54 = vector.load %arg11[%c0_29, %c0_30] : memref<1x256xf32, #tpu.memory_space<vmem>>, vector<1x256xf32>
    %55 = vector.broadcast %54 : vector<1x256xf32> to vector<32x256xf32>
    %56 = arith.addf %53, %55 : vector<32x256xf32>
    %57 = vector.extract_strided_slice %56 {offsets = [0, 0], sizes = [32, 128], strides = [1, 1]} : vector<32x256xf32> to vector<32x128xf32>
    %58 = vector.extract_strided_slice %56 {offsets = [0, 128], sizes = [32, 128], strides = [1, 1]} : vector<32x256xf32> to vector<32x128xf32>
    %59 = math.exp %58 : vector<32x128xf32>
    %60 = arith.mulf %59, %3 : vector<32x128xf32>
    %61 = arith.addf %57, %60 : vector<32x128xf32>
    %62 = arith.truncf %61 : vector<32x128xf32> to vector<32x128xbf16>
    %c0_31 = arith.constant 0 : index
    %c0_32 = arith.constant 0 : index
    %63 = vector.load %arg12[%c0_31, %c0_32] : memref<128x256xbf16, #tpu.memory_space<vmem>>, vector<128x256xbf16>
    %cst_33 = arith.constant dense<0.000000e+00> : vector<32x256xf32>
    %64 = tpu.matmul %62, %63, %cst_33 {dimension_numbers = #tpu.dot_dimension_numbers<[1], [0], [0], [1], [0, 0, 1, 1], [], []>} : vector<32x128xbf16>, vector<128x256xbf16>, vector<32x256xf32> -> vector<32x256xf32>
    %c0_34 = arith.constant 0 : index
    %c0_35 = arith.constant 0 : index
    %65 = vector.load %arg13[%c0_34, %c0_35] : memref<128x256xbf16, #tpu.memory_space<vmem>>, vector<128x256xbf16>
    %cst_36 = arith.constant dense<0.000000e+00> : vector<32x256xf32>
    %66 = tpu.matmul %31, %65, %cst_36 {dimension_numbers = #tpu.dot_dimension_numbers<[1], [0], [0], [1], [0, 0, 1, 1], [], []>} : vector<32x128xbf16>, vector<128x256xbf16>, vector<32x256xf32> -> vector<32x256xf32>
    %67 = arith.addf %64, %66 : vector<32x256xf32>
    %c0_37 = arith.constant 0 : index
    %c0_38 = arith.constant 0 : index
    %68 = vector.load %arg14[%c0_37, %c0_38] : memref<1x256xf32, #tpu.memory_space<vmem>>, vector<1x256xf32>
    %69 = vector.broadcast %68 : vector<1x256xf32> to vector<32x256xf32>
    %70 = arith.addf %67, %69 : vector<32x256xf32>
    %71 = math.tanh %70 : vector<32x256xf32>
    %72 = arith.truncf %71 : vector<32x256xf32> to vector<32x256xbf16>
    %c0_39 = arith.constant 0 : index
    %c0_40 = arith.constant 0 : index
    %73 = vector.load %arg15[%c0_39, %c0_40] : memref<256x256xbf16, #tpu.memory_space<vmem>>, vector<256x256xbf16>
    %cst_41 = arith.constant dense<0.000000e+00> : vector<32x256xf32>
    %74 = tpu.matmul %72, %73, %cst_41 {dimension_numbers = #tpu.dot_dimension_numbers<[1], [0], [0], [1], [0, 0, 1, 1], [], []>} : vector<32x256xbf16>, vector<256x256xbf16>, vector<32x256xf32> -> vector<32x256xf32>
    %c0_42 = arith.constant 0 : index
    %c0_43 = arith.constant 0 : index
    %75 = vector.load %arg16[%c0_42, %c0_43] : memref<1x256xf32, #tpu.memory_space<vmem>>, vector<1x256xf32>
    %76 = vector.broadcast %75 : vector<1x256xf32> to vector<32x256xf32>
    %77 = arith.addf %74, %76 : vector<32x256xf32>
    %78 = math.tanh %77 : vector<32x256xf32>
    %79 = arith.truncf %78 : vector<32x256xf32> to vector<32x256xbf16>
    %c0_44 = arith.constant 0 : index
    %c0_45 = arith.constant 0 : index
    %80 = vector.load %arg17[%c0_44, %c0_45] : memref<256x256xbf16, #tpu.memory_space<vmem>>, vector<256x256xbf16>
    %cst_46 = arith.constant dense<0.000000e+00> : vector<32x256xf32>
    %81 = tpu.matmul %79, %80, %cst_46 {dimension_numbers = #tpu.dot_dimension_numbers<[1], [0], [0], [1], [0, 0, 1, 1], [], []>} : vector<32x256xbf16>, vector<256x256xbf16>, vector<32x256xf32> -> vector<32x256xf32>
    %c0_47 = arith.constant 0 : index
    %c0_48 = arith.constant 0 : index
    %82 = vector.load %arg18[%c0_47, %c0_48] : memref<1x256xf32, #tpu.memory_space<vmem>>, vector<1x256xf32>
    %83 = vector.broadcast %82 : vector<1x256xf32> to vector<32x256xf32>
    %84 = arith.addf %81, %83 : vector<32x256xf32>
    %cst_49 = arith.constant 5.000000e-01 : f32
    %85 = vector.broadcast %cst_49 : f32 to vector<32x256xf32>
    %86 = arith.mulf %85, %84 : vector<32x256xf32>
    %87 = math.tanh %86 : vector<32x256xf32>
    %cst_50 = arith.constant 1.000000e+00 : f32
    %88 = vector.broadcast %cst_50 : f32 to vector<32x256xf32>
    %89 = arith.addf %87, %88 : vector<32x256xf32>
    %cst_51 = arith.constant 5.000000e-01 : f32
    %90 = vector.broadcast %cst_51 : f32 to vector<32x256xf32>
    %91 = arith.mulf %90, %89 : vector<32x256xf32>
    %c0_52 = arith.constant 0 : index
    %c0_53 = arith.constant 0 : index
    %92 = vector.load %arg19[%c0_52, %c0_53] : memref<32x256xf32, #tpu.memory_space<vmem>>, vector<32x256xf32>
    tpu.vector_store %arg19[%c0_52, %c0_53], %91 {strides = array<i32>} : memref<32x256xf32, #tpu.memory_space<vmem>>, vector<32x256xf32>,
    return
  }
  func.func @transform_0(%arg0: i32) -> (i32, i32) {
    %c0_i32 = arith.constant 0 : i32
    %c0_i32_0 = arith.constant 0 : i32
    return %arg0, %c0_i32 : i32, i32
  }
  func.func @transform_1(%arg0: i32) -> (i32, i32) {
    %c0_i32 = arith.constant 0 : i32
    %c0_i32_0 = arith.constant 0 : i32
    return %arg0, %c0_i32 : i32, i32
  }
  func.func @transform_2(%arg0: i32) -> (i32, i32) {
    %c0_i32 = arith.constant 0 : i32
    %c0_i32_0 = arith.constant 0 : i32
    %c0_i32_1 = arith.constant 0 : i32
    return %c0_i32, %c0_i32_0 : i32, i32
  }
  func.func @transform_3(%arg0: i32) -> (i32, i32) {
    %c0_i32 = arith.constant 0 : i32
    %c0_i32_0 = arith.constant 0 : i32
    %c0_i32_1 = arith.constant 0 : i32
    return %c0_i32, %c0_i32_0 : i32, i32
  }
  func.func @transform_4(%arg0: i32) -> (i32, i32) {
    %c0_i32 = arith.constant 0 : i32
    %c0_i32_0 = arith.constant 0 : i32
    %c0_i32_1 = arith.constant 0 : i32
    return %c0_i32, %c0_i32_0 : i32, i32
  }
  func.func @transform_5(%arg0: i32) -> (i32, i32) {
    %c0_i32 = arith.constant 0 : i32
    %c0_i32_0 = arith.constant 0 : i32
    %c0_i32_1 = arith.constant 0 : i32
    return %c0_i32, %c0_i32_0 : i32, i32
  }
  func.func @transform_6(%arg0: i32) -> (i32, i32) {
    %c0_i32 = arith.constant 0 : i32
    %c0_i32_0 = arith.constant 0 : i32
    %c0_i32_1 = arith.constant 0 : i32
    return %c0_i32, %c0_i32_0 : i32, i32
  }
  func.func @transform_7(%arg0: i32) -> (i32, i32) {
    %c0_i32 = arith.constant 0 : i32
    %c0_i32_0 = arith.constant 0 : i32
    %c0_i32_1 = arith.constant 0 : i32
    return %c0_i32, %c0_i32_0 : i32, i32
  }
  func.func @transform_8(%arg0: i32) -> (i32, i32) {
    %c0_i32 = arith.constant 0 : i32
    %c0_i32_0 = arith.constant 0 : i32
    %c0_i32_1 = arith.constant 0 : i32
    return %c0_i32, %c0_i32_0 : i32, i32
  }
  func.func @transform_9(%arg0: i32) -> (i32, i32) {
    %c0_i32 = arith.constant 0 : i32
    %c0_i32_0 = arith.constant 0 : i32
    %c0_i32_1 = arith.constant 0 : i32
    return %c0_i32, %c0_i32_0 : i32, i32
  }
  func.func @transform_10(%arg0: i32) -> (i32, i32) {
    %c0_i32 = arith.constant 0 : i32
    %c0_i32_0 = arith.constant 0 : i32
    %c0_i32_1 = arith.constant 0 : i32
    return %c0_i32, %c0_i32_0 : i32, i32
  }
  func.func @transform_11(%arg0: i32) -> (i32, i32) {
    %c0_i32 = arith.constant 0 : i32
    %c0_i32_0 = arith.constant 0 : i32
    %c0_i32_1 = arith.constant 0 : i32
    return %c0_i32, %c0_i32_0 : i32, i32
  }
  func.func @transform_12(%arg0: i32) -> (i32, i32) {
    %c0_i32 = arith.constant 0 : i32
    %c0_i32_0 = arith.constant 0 : i32
    %c0_i32_1 = arith.constant 0 : i32
    return %c0_i32, %c0_i32_0 : i32, i32
  }
  func.func @transform_13(%arg0: i32) -> (i32, i32) {
    %c0_i32 = arith.constant 0 : i32
    %c0_i32_0 = arith.constant 0 : i32
    %c0_i32_1 = arith.constant 0 : i32
    return %c0_i32, %c0_i32_0 : i32, i32
  }
  func.func @transform_14(%arg0: i32) -> (i32, i32) {
    %c0_i32 = arith.constant 0 : i32
    %c0_i32_0 = arith.constant 0 : i32
    %c0_i32_1 = arith.constant 0 : i32
    return %c0_i32, %c0_i32_0 : i32, i32
  }
  func.func @transform_15(%arg0: i32) -> (i32, i32) {
    %c0_i32 = arith.constant 0 : i32
    %c0_i32_0 = arith.constant 0 : i32
    %c0_i32_1 = arith.constant 0 : i32
    return %c0_i32, %c0_i32_0 : i32, i32
  }
  func.func @transform_16(%arg0: i32) -> (i32, i32) {
    %c0_i32 = arith.constant 0 : i32
    %c0_i32_0 = arith.constant 0 : i32
    %c0_i32_1 = arith.constant 0 : i32
    return %c0_i32, %c0_i32_0 : i32, i32
  }
  func.func @transform_17(%arg0: i32) -> (i32, i32) {
    %c0_i32 = arith.constant 0 : i32
    %c0_i32_0 = arith.constant 0 : i32
    %c0_i32_1 = arith.constant 0 : i32
    return %c0_i32, %c0_i32_0 : i32, i32
  }
  func.func @transform_18(%arg0: i32) -> (i32, i32) {
    %c0_i32 = arith.constant 0 : i32
    %c0_i32_0 = arith.constant 0 : i32
    return %arg0, %c0_i32 : i32, i32
  }
}

</mosaic_0001>

<llo_original>
// kernel: tdvae_reconstruct.1
$region0: #{tdvae_reconstruct.1}
  #allocation0 [shape = 'u32[]', space=smem, size = 0x4, offset = 0x4, fixed_abs, tag = 'smem constant byte address 0x4 - core index']
  #allocation1 [shape = 'u32[144,128]{1,0:T(1,128)}', space=vmem, size = 0x12000, scoped, tag = 'internal scratch']
  %s0 = inlined_call_operand.vmem [shape: bf16[64,128], index: 0, kind: input, shape index: {}]
  %s1 = inlined_call_operand.vmem [shape: f32[64,256], index: 1, kind: input, shape index: {}]
  %s2 = inlined_call_operand.hbm [shape: bf16[128,256], index: 2, kind: input, shape index: {}]
  %s3 = inlined_call_operand.vmem [shape: f32[1,256], index: 3, kind: input, shape index: {}]
  %s4 = inlined_call_operand.hbm [shape: bf16[128,256], index: 4, kind: input, shape index: {}]
  %s5 = inlined_call_operand.hbm [shape: f32[1,256], index: 5, kind: input, shape index: {}]
  %s6 = inlined_call_operand.vmem [shape: bf16[128,256], index: 6, kind: input, shape index: {}]
  %s7 = inlined_call_operand.hbm [shape: bf16[128,256], index: 7, kind: input, shape index: {}]
  %s8 = inlined_call_operand.vmem [shape: f32[1,256], index: 8, kind: input, shape index: {}]
  %s9 = inlined_call_operand.hbm [shape: bf16[128,256], index: 9, kind: input, shape index: {}]
  %s10 = inlined_call_operand.vmem [shape: f32[1,256], index: 10, kind: input, shape index: {}]
  %s11 = inlined_call_operand.hbm [shape: bf16[128,256], index: 11, kind: input, shape index: {}]
  %s12 = inlined_call_operand.hbm [shape: bf16[128,256], index: 12, kind: input, shape index: {}]
  %s13 = inlined_call_operand.vmem [shape: f32[1,256], index: 13, kind: input, shape index: {}]
  %s14 = inlined_call_operand.vmem [shape: bf16[256,256], index: 14, kind: input, shape index: {}]
  %s15 = inlined_call_operand.vmem [shape: f32[1,256], index: 15, kind: input, shape index: {}]
  %s16 = inlined_call_operand.vmem [shape: bf16[256,256], index: 16, kind: input, shape index: {}]
  %s17 = inlined_call_operand.vmem [shape: f32[1,256], index: 17, kind: input, shape index: {}]
  %s18 = inlined_call_operand.hbm [shape: f32[64,256], index: 18, kind: output, shape index: {}]
  %s19 = sld [smem:[#allocation0]]
  $region133: #{tdvae_reconstruct.1} parent=0
    _
  %s21 = ssub.s32 1, %s19
  %s22 = scalar_select 0, %s21, %s19
  $region1: #{tdvae_reconstruct.1} parent=0
    #allocation2 [shape = 'u8[65536]{0}', space=vmem, size = 0x10000, scoped, tag = 'input window, operand 2, single buffered']
    #allocation3 [shape = 's32[2]{0}', space=sflag, size = 0x8, scoped, tag = 'scoped memory for tdvae_reconstruct.1']
    #allocation4 [shape = 's32[2]{0}', space=sflag, size = 0x8, scoped, tag = 'scoped memory for tdvae_reconstruct.1']
    #allocation5 [shape = 'u8[65536]{0}', space=vmem, size = 0x10000, scoped, tag = 'input window, operand 4, single buffered']
    #allocation6 [shape = 's32[1]{0}', space=sflag, size = 0x4, scoped, tag = 'scoped memory for tdvae_reconstruct.1']
    #allocation7 [shape = 'u8[1024]{0}', space=vmem, size = 0x400, scoped, tag = 'input window, operand 5, single buffered']
    #allocation8 [shape = 'u8[65536]{0}', space=vmem, size = 0x10000, scoped, tag = 'input window, operand 7, single buffered']
    #allocation9 [shape = 's32[1]{0}', space=sflag, size = 0x4, scoped, tag = 'scoped memory for tdvae_reconstruct.1']
    #allocation10 [shape = 'u8[65536]{0}', space=vmem, size = 0x10000, scoped, tag = 'input window, operand 9, single buffered']
    #allocation11 [shape = 'u8[65536]{0}', space=vmem, size = 0x10000, scoped, tag = 'input window, operand 11, single buffered']
    #allocation12 [shape = 's32[1]{0}', space=sflag, size = 0x4, scoped, tag = 'scoped memory for tdvae_reconstruct.1']
    #allocation13 [shape = 'u8[65536]{0}', space=vmem, size = 0x10000, scoped, tag = 'input window, operand 12, single buffered']
    #allocation14 [shape = 'u8[65536]{0}', space=vmem, size = 0x10000, scoped, tag = 'output window, operand 0']
    %23 = vsyncpa [#allocation3], 0
    %24 = vsyncpa [#allocation6], 0
    %25 = vsyncpa [#allocation9], 0
    %26 = vsyncpa [#allocation12], 0
    %27 = vsyncpa [#allocation4], 0
    %s28 = scalar_lea.sflag [#allocation4], 1
    %29 = vsyncpa %s28, 0
    loop: start=0, step=1, limit=4
    $region2: #{tdvae_reconstruct.1} parent=1 // loop_pre_header
      _
    $region3: #{tdvae_reconstruct.1} parent=1 // loop_header
      %s31 = sphi 0, %s35
      %p32 = scmp.ge.s32.totalorder %s31, 4
      %s41 = sphi 0, %s43
      %s44 = sphi 0, %s41
      %s45 = sphi 0, %s44
      %s61 = sphi 0, %s45
      %s67 = sphi 0, %s69
      %s70 = sphi 0, %s67
      %s71 = sphi 0, %s70
      %s87 = sphi 0, %s71
      %s91 = sphi 0, %s91
      %s93 = sphi 0, %s91
      %s94 = sphi 0, %s93
      %s108 = sphi 0, %s94
      %s112 = sphi 0, %s112
      %s114 = sphi 0, %s112
      %s115 = sphi 0, %s114
      %s129 = sphi 0, %s115
      %s133 = sphi 0, %s133
      %s135 = sphi 0, %s133
      %s136 = sphi 0, %s135
      %s150 = sphi 0, %s136
      %s154 = sphi 0, %s154
      %s156 = sphi 0, %s154
      %s157 = sphi 0, %s156
      %s171 = sphi 0, %s157
      %s175 = sphi 0, %s175
      %s177 = sphi 0, %s175
      %s178 = sphi 0, %s177
      %s192 = sphi 0, %s178
      %s196 = sphi 0, %s196
      %s198 = sphi 0, %s196
      %s199 = sphi 0, %s198
      %s213 = sphi 0, %s199
      %s217 = sphi 0, %s217
      %s219 = sphi 0, %s217
      %s220 = sphi 0, %s219
      %s234 = sphi 0, %s220
      %s238 = sphi 0, %s238
      %s240 = sphi 0, %s238
      %s241 = sphi 0, %s240
      %s255 = sphi 0, %s241
      %s259 = sphi 0, %s259
      %s261 = sphi 0, %s259
      %s262 = sphi 0, %s261
      %s276 = sphi 0, %s262
      %s280 = sphi 0, %s280
      %s282 = sphi 0, %s280
      %s283 = sphi 0, %s282
      %s297 = sphi 0, %s283
      %s301 = sphi 0, %s301
      %s303 = sphi 0, %s301
      %s304 = sphi 0, %s303
      %s318 = sphi 0, %s304
      %s322 = sphi 0, %s322
      %s324 = sphi 0, %s322
      %s325 = sphi 0, %s324
      %s339 = sphi 0, %s325
      %s343 = sphi 0, %s343
      %s345 = sphi 0, %s343
      %s346 = sphi 0, %s345
      %s360 = sphi 0, %s346
      %s364 = sphi 0, %s364
      %s366 = sphi 0, %s364
      %s367 = sphi 0, %s366
      %s381 = sphi 0, %s367
      %s385 = sphi 0, %s385
      %s387 = sphi 0, %s385
      %s388 = sphi 0, %s387
      %s402 = sphi 0, %s388
      %s406 = sphi 0, %s406
      %s408 = sphi 0, %s406
      %s409 = sphi 0, %s408
      %s423 = sphi 0, %s409
      %s429 = sphi 0, %s431
      %s432 = sphi 0, %s429
      %s433 = sphi 0, %s432
      %s449 = sphi 0, %s433
    $region4: #{tdvae_reconstruct.1} parent=1 // loop_header_branch
      %34 = sbr.rel (%p32) target = $region8
    $region5: #{tdvae_reconstruct.1} parent=1 // loop_body
      %s36 = ssub.s32 %s31, 1
      %s37 = ssub.s32 %s31, 2
      %s38 = sadd.s32 %s31, 1
      %s39 = ssub.s32 %s31, %s38
      %p40 = scmp.eq.s32.totalorder %s39, 0
      %s42 = sadd.s32 %s41, 1
      %s43 = scalar_select %p40, %s41, %s42
      %p46 = pneg %p40
      %p47 = scmp.eq.s32.totalorder %s31, 1
      %p48 = por %p46, %p47
      %p49 = scmp.ne.s32.totalorder %s41, %s44
      %p50 = scmp.eq.s32.totalorder %s31, 0
      %p51 = por %p49, %p50
      %p52 = scmp.ne.s32.totalorder %s41, %s44
      %p53 = scmp.eq.s32.totalorder %s36, 1
      %p54 = por %p52, %p53
      %p55 = scmp.ne.s32.totalorder %s44, %s45
      %p56 = scmp.eq.s32.totalorder %s36, 0
      %p57 = por %p55, %p56
      %p58 = scmp.ne.s32.totalorder %s44, %s45
      %p59 = scmp.eq.s32.totalorder %s37, 1
      %p60 = por %p58, %p59
      %p62 = scmp.ne.s32.totalorder %s45, %s61
      %p63 = scmp.eq.s32.totalorder %s37, 0
      %p64 = por %p62, %p63
      %s65 = ssub.s32 %s31, %s38
      %p66 = scmp.eq.s32.totalorder %s65, 0
      %s68 = sadd.s32 %s67, 1
      %s69 = scalar_select %p66, %s67, %s68
      %p72 = pneg %p66
      %p73 = scmp.eq.s32.totalorder %s31, 1
      %p74 = por %p72, %p73
      %p75 = scmp.ne.s32.totalorder %s67, %s70
      %p76 = scmp.eq.s32.totalorder %s31, 0
      %p77 = por %p75, %p76
      %p78 = scmp.ne.s32.totalorder %s67, %s70
      %p79 = scmp.eq.s32.totalorder %s36, 1
      %p80 = por %p78, %p79
      %p81 = scmp.ne.s32.totalorder %s70, %s71
      %p82 = scmp.eq.s32.totalorder %s36, 0
      %p83 = por %p81, %p82
      %p84 = scmp.ne.s32.totalorder %s70, %s71
      %p85 = scmp.eq.s32.totalorder %s37, 1
      %p86 = por %p84, %p85
      %p88 = scmp.ne.s32.totalorder %s71, %s87
      %p89 = scmp.eq.s32.totalorder %s37, 0
      %p90 = por %p88, %p89
      %s92 = sadd.s32 %s91, 1
      %p95 = scmp.eq.s32.totalorder %s31, 1
      %p96 = scmp.ne.s32.totalorder %s91, %s93
      %p97 = scmp.eq.s32.totalorder %s31, 0
      %p98 = por %p96, %p97
      %p99 = scmp.ne.s32.totalorder %s91, %s93
      %p100 = scmp.eq.s32.totalorder %s36, 1
      %p101 = por %p99, %p100
      %p102 = scmp.ne.s32.totalorder %s93, %s94
      %p103 = scmp.eq.s32.totalorder %s36, 0
      %p104 = por %p102, %p103
      %p105 = scmp.ne.s32.totalorder %s93, %s94
      %p106 = scmp.eq.s32.totalorder %s37, 1
      %p107 = por %p105, %p106
      %p109 = scmp.ne.s32.totalorder %s94, %s108
      %p110 = scmp.eq.s32.totalorder %s37, 0
      %p111 = por %p109, %p110
      %s113 = sadd.s32 %s112, 1
      %p116 = scmp.eq.s32.totalorder %s31, 1
      %p117 = scmp.ne.s32.totalorder %s112, %s114
      %p118 = scmp.eq.s32.totalorder %s31, 0
      %p119 = por %p117, %p118
      %p120 = scmp.ne.s32.totalorder %s112, %s114
      %p121 = scmp.eq.s32.totalorder %s36, 1
      %p122 = por %p120, %p121
      %p123 = scmp.ne.s32.totalorder %s114, %s115
      %p124 = scmp.eq.s32.totalorder %s36, 0
      %p125 = por %p123, %p124
      %p126 = scmp.ne.s32.totalorder %s114, %s115
      %p127 = scmp.eq.s32.totalorder %s37, 1
      %p128 = por %p126, %p127
      %p130 = scmp.ne.s32.totalorder %s115, %s129
      %p131 = scmp.eq.s32.totalorder %s37, 0
      %p132 = por %p130, %p131
      %s134 = sadd.s32 %s133, 1
      %p137 = scmp.eq.s32.totalorder %s31, 1
      %p138 = scmp.ne.s32.totalorder %s133, %s135
      %p139 = scmp.eq.s32.totalorder %s31, 0
      %p140 = por %p138, %p139
      %p141 = scmp.ne.s32.totalorder %s133, %s135
      %p142 = scmp.eq.s32.totalorder %s36, 1
      %p143 = por %p141, %p142
      %p144 = scmp.ne.s32.totalorder %s135, %s136
      %p145 = scmp.eq.s32.totalorder %s36, 0
      %p146 = por %p144, %p145
      %p147 = scmp.ne.s32.totalorder %s135, %s136
      %p148 = scmp.eq.s32.totalorder %s37, 1
      %p149 = por %p147, %p148
      %p151 = scmp.ne.s32.totalorder %s136, %s150
      %p152 = scmp.eq.s32.totalorder %s37, 0
      %p153 = por %p151, %p152
      %s155 = sadd.s32 %s154, 1
      %p158 = scmp.eq.s32.totalorder %s31, 1
      %p159 = scmp.ne.s32.totalorder %s154, %s156
      %p160 = scmp.eq.s32.totalorder %s31, 0
      %p161 = por %p159, %p160
      %p162 = scmp.ne.s32.totalorder %s154, %s156
      %p163 = scmp.eq.s32.totalorder %s36, 1
      %p164 = por %p162, %p163
      %p165 = scmp.ne.s32.totalorder %s156, %s157
      %p166 = scmp.eq.s32.totalorder %s36, 0
      %p167 = por %p165, %p166
      %p168 = scmp.ne.s32.totalorder %s156, %s157
      %p169 = scmp.eq.s32.totalorder %s37, 1
      %p170 = por %p168, %p169
      %p172 = scmp.ne.s32.totalorder %s157, %s171
      %p173 = scmp.eq.s32.totalorder %s37, 0
      %p174 = por %p172, %p173
      %s176 = sadd.s32 %s175, 1
      %p179 = scmp.eq.s32.totalorder %s31, 1
      %p180 = scmp.ne.s32.totalorder %s175, %s177
      %p181 = scmp.eq.s32.totalorder %s31, 0
      %p182 = por %p180, %p181
      %p183 = scmp.ne.s32.totalorder %s175, %s177
      %p184 = scmp.eq.s32.totalorder %s36, 1
      %p185 = por %p183, %p184
      %p186 = scmp.ne.s32.totalorder %s177, %s178
      %p187 = scmp.eq.s32.totalorder %s36, 0
      %p188 = por %p186, %p187
      %p189 = scmp.ne.s32.totalorder %s177, %s178
      %p190 = scmp.eq.s32.totalorder %s37, 1
      %p191 = por %p189, %p190
      %p193 = scmp.ne.s32.totalorder %s178, %s192
      %p194 = scmp.eq.s32.totalorder %s37, 0
      %p195 = por %p193, %p194
      %s197 = sadd.s32 %s196, 1
      %p200 = scmp.eq.s32.totalorder %s31, 1
      %p201 = scmp.ne.s32.totalorder %s196, %s198
      %p202 = scmp.eq.s32.totalorder %s31, 0
      %p203 = por %p201, %p202
      %p204 = scmp.ne.s32.totalorder %s196, %s198
      %p205 = scmp.eq.s32.totalorder %s36, 1
      %p206 = por %p204, %p205
      %p207 = scmp.ne.s32.totalorder %s198, %s199
      %p208 = scmp.eq.s32.totalorder %s36, 0
      %p209 = por %p207, %p208
      %p210 = scmp.ne.s32.totalorder %s198, %s199
      %p211 = scmp.eq.s32.totalorder %s37, 1
      %p212 = por %p210, %p211
      %p214 = scmp.ne.s32.totalorder %s199, %s213
      %p215 = scmp.eq.s32.totalorder %s37, 0
      %p216 = por %p214, %p215
      %s218 = sadd.s32 %s217, 1
      %p221 = scmp.eq.s32.totalorder %s31, 1
      %p222 = scmp.ne.s32.totalorder %s217, %s219
      %p223 = scmp.eq.s32.totalorder %s31, 0
      %p224 = por %p222, %p223
      %p225 = scmp.ne.s32.totalorder %s217, %s219
      %p226 = scmp.eq.s32.totalorder %s36, 1
      %p227 = por %p225, %p226
      %p228 = scmp.ne.s32.totalorder %s219, %s220
      %p229 = scmp.eq.s32.totalorder %s36, 0
      %p230 = por %p228, %p229
      %p231 = scmp.ne.s32.totalorder %s219, %s220
      %p232 = scmp.eq.s32.totalorder %s37, 1
      %p233 = por %p231, %p232
      %p235 = scmp.ne.s32.totalorder %s220, %s234
      %p236 = scmp.eq.s32.totalorder %s37, 0
      %p237 = por %p235, %p236
      %s239 = sadd.s32 %s238, 1
      %p242 = scmp.eq.s32.totalorder %s31, 1
      %p243 = scmp.ne.s32.totalorder %s238, %s240
      %p244 = scmp.eq.s32.totalorder %s31, 0
      %p245 = por %p243, %p244
      %p246 = scmp.ne.s32.totalorder %s238, %s240
      %p247 = scmp.eq.s32.totalorder %s36, 1
      %p248 = por %p246, %p247
      %p249 = scmp.ne.s32.totalorder %s240, %s241
      %p250 = scmp.eq.s32.totalorder %s36, 0
      %p251 = por %p249, %p250
      %p252 = scmp.ne.s32.totalorder %s240, %s241
      %p253 = scmp.eq.s32.totalorder %s37, 1
      %p254 = por %p252, %p253
      %p256 = scmp.ne.s32.totalorder %s241, %s255
      %p257 = scmp.eq.s32.totalorder %s37, 0
      %p258 = por %p256, %p257
      %s260 = sadd.s32 %s259, 1
      %p263 = scmp.eq.s32.totalorder %s31, 1
      %p264 = scmp.ne.s32.totalorder %s259, %s261
      %p265 = scmp.eq.s32.totalorder %s31, 0
      %p266 = por %p264, %p265
      %p267 = scmp.ne.s32.totalorder %s259, %s261
      %p268 = scmp.eq.s32.totalorder %s36, 1
      %p269 = por %p267, %p268
      %p270 = scmp.ne.s32.totalorder %s261, %s262
      %p271 = scmp.eq.s32.totalorder %s36, 0
      %p272 = por %p270, %p271
      %p273 = scmp.ne.s32.totalorder %s261, %s262
      %p274 = scmp.eq.s32.totalorder %s37, 1
      %p275 = por %p273, %p274
      %p277 = scmp.ne.s32.totalorder %s262, %s276
      %p278 = scmp.eq.s32.totalorder %s37, 0
      %p279 = por %p277, %p278
      %s281 = sadd.s32 %s280, 1
      %p284 = scmp.eq.s32.totalorder %s31, 1
      %p285 = scmp.ne.s32.totalorder %s280, %s282
      %p286 = scmp.eq.s32.totalorder %s31, 0
      %p287 = por %p285, %p286
      %p288 = scmp.ne.s32.totalorder %s280, %s282
      %p289 = scmp.eq.s32.totalorder %s36, 1
      %p290 = por %p288, %p289
      %p291 = scmp.ne.s32.totalorder %s282, %s283
      %p292 = scmp.eq.s32.totalorder %s36, 0
      %p293 = por %p291, %p292
      %p294 = scmp.ne.s32.totalorder %s282, %s283
      %p295 = scmp.eq.s32.totalorder %s37, 1
      %p296 = por %p294, %p295
      %p298 = scmp.ne.s32.totalorder %s283, %s297
      %p299 = scmp.eq.s32.totalorder %s37, 0
      %p300 = por %p298, %p299
      %s302 = sadd.s32 %s301, 1
      %p305 = scmp.eq.s32.totalorder %s31, 1
      %p306 = scmp.ne.s32.totalorder %s301, %s303
      %p307 = scmp.eq.s32.totalorder %s31, 0
      %p308 = por %p306, %p307
      %p309 = scmp.ne.s32.totalorder %s301, %s303
      %p310 = scmp.eq.s32.totalorder %s36, 1
      %p311 = por %p309, %p310
      %p312 = scmp.ne.s32.totalorder %s303, %s304
      %p313 = scmp.eq.s32.totalorder %s36, 0
      %p314 = por %p312, %p313
      %p315 = scmp.ne.s32.totalorder %s303, %s304
      %p316 = scmp.eq.s32.totalorder %s37, 1
      %p317 = por %p315, %p316
      %p319 = scmp.ne.s32.totalorder %s304, %s318
      %p320 = scmp.eq.s32.totalorder %s37, 0
      %p321 = por %p319, %p320
      %s323 = sadd.s32 %s322, 1
      %p326 = scmp.eq.s32.totalorder %s31, 1
      %p327 = scmp.ne.s32.totalorder %s322, %s324
      %p328 = scmp.eq.s32.totalorder %s31, 0
      %p329 = por %p327, %p328
      %p330 = scmp.ne.s32.totalorder %s322, %s324
      %p331 = scmp.eq.s32.totalorder %s36, 1
      %p332 = por %p330, %p331
      %p333 = scmp.ne.s32.totalorder %s324, %s325
      %p334 = scmp.eq.s32.totalorder %s36, 0
      %p335 = por %p333, %p334
      %p336 = scmp.ne.s32.totalorder %s324, %s325
      %p337 = scmp.eq.s32.totalorder %s37, 1
      %p338 = por %p336, %p337
      %p340 = scmp.ne.s32.totalorder %s325, %s339
      %p341 = scmp.eq.s32.totalorder %s37, 0
      %p342 = por %p340, %p341
      %s344 = sadd.s32 %s343, 1
      %p347 = scmp.eq.s32.totalorder %s31, 1
      %p348 = scmp.ne.s32.totalorder %s343, %s345
      %p349 = scmp.eq.s32.totalorder %s31, 0
      %p350 = por %p348, %p349
      %p351 = scmp.ne.s32.totalorder %s343, %s345
      %p352 = scmp.eq.s32.totalorder %s36, 1
      %p353 = por %p351, %p352
      %p354 = scmp.ne.s32.totalorder %s345, %s346
      %p355 = scmp.eq.s32.totalorder %s36, 0
      %p356 = por %p354, %p355
      %p357 = scmp.ne.s32.totalorder %s345, %s346
      %p358 = scmp.eq.s32.totalorder %s37, 1
      %p359 = por %p357, %p358
      %p361 = scmp.ne.s32.totalorder %s346, %s360
      %p362 = scmp.eq.s32.totalorder %s37, 0
      %p363 = por %p361, %p362
      %s365 = sadd.s32 %s364, 1
      %p368 = scmp.eq.s32.totalorder %s31, 1
      %p369 = scmp.ne.s32.totalorder %s364, %s366
      %p370 = scmp.eq.s32.totalorder %s31, 0
      %p371 = por %p369, %p370
      %p372 = scmp.ne.s32.totalorder %s364, %s366
      %p373 = scmp.eq.s32.totalorder %s36, 1
      %p374 = por %p372, %p373
      %p375 = scmp.ne.s32.totalorder %s366, %s367
      %p376 = scmp.eq.s32.totalorder %s36, 0
      %p377 = por %p375, %p376
      %p378 = scmp.ne.s32.totalorder %s366, %s367
      %p379 = scmp.eq.s32.totalorder %s37, 1
      %p380 = por %p378, %p379
      %p382 = scmp.ne.s32.totalorder %s367, %s381
      %p383 = scmp.eq.s32.totalorder %s37, 0
      %p384 = por %p382, %p383
      %s386 = sadd.s32 %s385, 1
      %p389 = scmp.eq.s32.totalorder %s31, 1
      %p390 = scmp.ne.s32.totalorder %s385, %s387
      %p391 = scmp.eq.s32.totalorder %s31, 0
      %p392 = por %p390, %p391
      %p393 = scmp.ne.s32.totalorder %s385, %s387
      %p394 = scmp.eq.s32.totalorder %s36, 1
      %p395 = por %p393, %p394
      %p396 = scmp.ne.s32.totalorder %s387, %s388
      %p397 = scmp.eq.s32.totalorder %s36, 0
      %p398 = por %p396, %p397
      %p399 = scmp.ne.s32.totalorder %s387, %s388
      %p400 = scmp.eq.s32.totalorder %s37, 1
      %p401 = por %p399, %p400
      %p403 = scmp.ne.s32.totalorder %s388, %s402
      %p404 = scmp.eq.s32.totalorder %s37, 0
      %p405 = por %p403, %p404
      %s407 = sadd.s32 %s406, 1
      %p410 = scmp.eq.s32.totalorder %s31, 1
      %p411 = scmp.ne.s32.totalorder %s406, %s408
      %p412 = scmp.eq.s32.totalorder %s31, 0
      %p413 = por %p411, %p412
      %p414 = scmp.ne.s32.totalorder %s406, %s408
      %p415 = scmp.eq.s32.totalorder %s36, 1
      %p416 = por %p414, %p415
      %p417 = scmp.ne.s32.totalorder %s408, %s409
      %p418 = scmp.eq.s32.totalorder %s36, 0
      %p419 = por %p417, %p418
      %p420 = scmp.ne.s32.totalorder %s408, %s409
      %p421 = scmp.eq.s32.totalorder %s37, 1
      %p422 = por %p420, %p421
      %p424 = scmp.ne.s32.totalorder %s409, %s423
      %p425 = scmp.eq.s32.totalorder %s37, 0
      %p426 = por %p424, %p425
      %s427 = ssub.s32 %s31, %s38
      %p428 = scmp.eq.s32.totalorder %s427, 0
      %s430 = sadd.s32 %s429, 1
      %s431 = scalar_select %p428, %s429, %s430
      %p434 = pneg %p428
      %p435 = scmp.eq.s32.totalorder %s31, 1
      %p436 = por %p434, %p435
      %p437 = scmp.ne.s32.totalorder %s429, %s432
      %p438 = scmp.eq.s32.totalorder %s31, 0
      %p439 = por %p437, %p438
      %p440 = scmp.ne.s32.totalorder %s429, %s432
      %p441 = scmp.eq.s32.totalorder %s36, 1
      %p442 = por %p440, %p441
      %p443 = scmp.ne.s32.totalorder %s432, %s433
      %p444 = scmp.eq.s32.totalorder %s36, 0
      %p445 = por %p443, %p444
      %p446 = scmp.ne.s32.totalorder %s432, %s433
      %p447 = scmp.eq.s32.totalorder %s37, 1
      %p448 = por %p446, %p447
      %p450 = scmp.ne.s32.totalorder %s433, %s449
      %p451 = scmp.eq.s32.totalorder %s37, 0
      %p452 = por %p450, %p451
      %p453 = scmp.le.s32.totalorder 1, %s31
      %p454 = scmp.lt.s32.totalorder %s31, 3
      %p455 = pnand %p453, %p454
      %p456 = pneg %p455
      // Predicated region
      $region9: #{tdvae_reconstruct.1} parent=5 // pred_check
        _
      $region10: #{tdvae_reconstruct.1} parent=5 // pred_check_branch
        %458 = sbr.rel (%p455) target = $region12
      $region11: #{tdvae_reconstruct.1} parent=5 // pred_region
        %s459 = ssub.s32 %s31, 1
        // Predicated region
        $region13: #{tdvae_reconstruct.1} parent=11 // pred_check
          %p460 = pneg %p104
        $region14: #{tdvae_reconstruct.1} parent=11 // pred_check_branch
          %462 = sbr.rel (%p460) target = $region16
        $region15: #{tdvae_reconstruct.1} parent=11 // pred_region
          %s464 = ssub.s32 2048, 2048
          %465 = vsyncadd [#allocation3], %s464
          %s466 = sshll.u32 [#allocation2], 4
          %s467 = int_to_ptr.vmem [resolvable:$true] %s466
          %472 = dma.hbm_to_vmem [thread:$0]  %s2, 2048, %s467, [#allocation3], 128, 128, 8
        $region16: #{tdvae_reconstruct.1} parent=11 // pred_fallthru
          _
        // Predicated region
        $region17: #{tdvae_reconstruct.1} parent=11 // pred_check
          %p473 = pneg %p125
        $region18: #{tdvae_reconstruct.1} parent=11 // pred_check_branch
          %475 = sbr.rel (%p473) target = $region20
        $region19: #{tdvae_reconstruct.1} parent=11 // pred_region
          _
        $region20: #{tdvae_reconstruct.1} parent=11 // pred_fallthru
          _
        // Predicated region
        $region21: #{tdvae_reconstruct.1} parent=11 // pred_check
          %p476 = pneg %p146
        $region22: #{tdvae_reconstruct.1} parent=11 // pred_check_branch
          %478 = sbr.rel (%p476) target = $region24
        $region23: #{tdvae_reconstruct.1} parent=11 // pred_region
          %s480 = ssub.s32 2048, 2048
          %481 = vsyncadd [#allocation6], %s480
          %s482 = sshll.u32 [#allocation5], 4
          %s483 = int_to_ptr.vmem [resolvable:$true] %s482
          %488 = dma.hbm_to_vmem [thread:$0]  %s4, 2048, %s483, [#allocation6], 128, 128, 8
        $region24: #{tdvae_reconstruct.1} parent=11 // pred_fallthru
          _
        // Predicated region
        $region25: #{tdvae_reconstruct.1} parent=11 // pred_check
          %p489 = pneg %p167
        $region26: #{tdvae_reconstruct.1} parent=11 // pred_check_branch
          %491 = sbr.rel (%p489) target = $region28
        $region27: #{tdvae_reconstruct.1} parent=11 // pred_region
          %s493 = ssub.s32 32, 32
          %494 = vsyncadd [#allocation6], %s493
          %s496 = sshll.u32 [#allocation7], 4
          %s497 = int_to_ptr.vmem [resolvable:$true] %s496
          %499 = dma.hbm_to_vmem [thread:$0]  %s5, 32, %s497, [#allocation6]
        $region28: #{tdvae_reconstruct.1} parent=11 // pred_fallthru
          _
        // Predicated region
        $region29: #{tdvae_reconstruct.1} parent=11 // pred_check
          %p500 = pneg %p188
        $region30: #{tdvae_reconstruct.1} parent=11 // pred_check_branch
          %502 = sbr.rel (%p500) target = $region32
        $region31: #{tdvae_reconstruct.1} parent=11 // pred_region
          _
        $region32: #{tdvae_reconstruct.1} parent=11 // pred_fallthru
          _
        // Predicated region
        $region33: #{tdvae_reconstruct.1} parent=11 // pred_check
          %p503 = pneg %p209
        $region34: #{tdvae_reconstruct.1} parent=11 // pred_check_branch
          %505 = sbr.rel (%p503) target = $region36
        $region35: #{tdvae_reconstruct.1} parent=11 // pred_region
          %s507 = ssub.s32 2048, 2048
          %508 = vsyncadd [#allocation9], %s507
          %s509 = sshll.u32 [#allocation8], 4
          %s510 = int_to_ptr.vmem [resolvable:$true] %s509
          %515 = dma.hbm_to_vmem [thread:$0]  %s7, 2048, %s510, [#allocation9], 128, 128, 8
        $region36: #{tdvae_reconstruct.1} parent=11 // pred_fallthru
          _
        // Predicated region
        $region37: #{tdvae_reconstruct.1} parent=11 // pred_check
          %p516 = pneg %p230
        $region38: #{tdvae_reconstruct.1} parent=11 // pred_check_branch
          %518 = sbr.rel (%p516) target = $region40
        $region39: #{tdvae_reconstruct.1} parent=11 // pred_region
          _
        $region40: #{tdvae_reconstruct.1} parent=11 // pred_fallthru
          _
        // Predicated region
        $region41: #{tdvae_reconstruct.1} parent=11 // pred_check
          %p519 = pneg %p251
        $region42: #{tdvae_reconstruct.1} parent=11 // pred_check_branch
          %521 = sbr.rel (%p519) target = $region44
        $region43: #{tdvae_reconstruct.1} parent=11 // pred_region
          %s523 = ssub.s32 2048, 2048
          %524 = vsyncadd [#allocation9], %s523
          %s525 = sshll.u32 [#allocation10], 4
          %s526 = int_to_ptr.vmem [resolvable:$true] %s525
          %531 = dma.hbm_to_vmem [thread:$0]  %s9, 2048, %s526, [#allocation9], 128, 128, 8
        $region44: #{tdvae_reconstruct.1} parent=11 // pred_fallthru
          _
        // Predicated region
        $region45: #{tdvae_reconstruct.1} parent=11 // pred_check
          %p532 = pneg %p272
        $region46: #{tdvae_reconstruct.1} parent=11 // pred_check_branch
          %534 = sbr.rel (%p532) target = $region48
        $region47: #{tdvae_reconstruct.1} parent=11 // pred_region
          _
        $region48: #{tdvae_reconstruct.1} parent=11 // pred_fallthru
          _
        // Predicated region
        $region49: #{tdvae_reconstruct.1} parent=11 // pred_check
          %p535 = pneg %p293
        $region50: #{tdvae_reconstruct.1} parent=11 // pred_check_branch
          %537 = sbr.rel (%p535) target = $region52
        $region51: #{tdvae_reconstruct.1} parent=11 // pred_region
          %s539 = ssub.s32 2048, 2048
          %540 = vsyncadd [#allocation12], %s539
          %s541 = sshll.u32 [#allocation11], 4
          %s542 = int_to_ptr.vmem [resolvable:$true] %s541
          %547 = dma.hbm_to_vmem [thread:$0]  %s11, 2048, %s542, [#allocation12], 128, 128, 8
        $region52: #{tdvae_reconstruct.1} parent=11 // pred_fallthru
          _
        // Predicated region
        $region53: #{tdvae_reconstruct.1} parent=11 // pred_check
          %p548 = pneg %p314
        $region54: #{tdvae_reconstruct.1} parent=11 // pred_check_branch
          %550 = sbr.rel (%p548) target = $region56
        $region55: #{tdvae_reconstruct.1} parent=11 // pred_region
          %s552 = ssub.s32 2048, 2048
          %553 = vsyncadd [#allocation12], %s552
          %s554 = sshll.u32 [#allocation13], 4
          %s555 = int_to_ptr.vmem [resolvable:$true] %s554
          %560 = dma.hbm_to_vmem [thread:$0]  %s12, 2048, %s555, [#allocation12], 128, 128, 8
        $region56: #{tdvae_reconstruct.1} parent=11 // pred_fallthru
          _
        // Predicated region
        $region57: #{tdvae_reconstruct.1} parent=11 // pred_check
          %p561 = pneg %p335
        $region58: #{tdvae_reconstruct.1} parent=11 // pred_check_branch
          %563 = sbr.rel (%p561) target = $region60
        $region59: #{tdvae_reconstruct.1} parent=11 // pred_region
          _
        $region60: #{tdvae_reconstruct.1} parent=11 // pred_fallthru
          _
        // Predicated region
        $region61: #{tdvae_reconstruct.1} parent=11 // pred_check
          %p564 = pneg %p356
        $region62: #{tdvae_reconstruct.1} parent=11 // pred_check_branch
          %566 = sbr.rel (%p564) target = $region64
        $region63: #{tdvae_reconstruct.1} parent=11 // pred_region
          _
        $region64: #{tdvae_reconstruct.1} parent=11 // pred_fallthru
          _
        // Predicated region
        $region65: #{tdvae_reconstruct.1} parent=11 // pred_check
          %p567 = pneg %p377
        $region66: #{tdvae_reconstruct.1} parent=11 // pred_check_branch
          %569 = sbr.rel (%p567) target = $region68
        $region67: #{tdvae_reconstruct.1} parent=11 // pred_region
          _
        $region68: #{tdvae_reconstruct.1} parent=11 // pred_fallthru
          _
        // Predicated region
        $region69: #{tdvae_reconstruct.1} parent=11 // pred_check
          %p570 = pneg %p398
        $region70: #{tdvae_reconstruct.1} parent=11 // pred_check_branch
          %572 = sbr.rel (%p570) target = $region72
        $region71: #{tdvae_reconstruct.1} parent=11 // pred_region
          _
        $region72: #{tdvae_reconstruct.1} parent=11 // pred_fallthru
          _
        // Predicated region
        $region73: #{tdvae_reconstruct.1} parent=11 // pred_check
          %p573 = pneg %p419
        $region74: #{tdvae_reconstruct.1} parent=11 // pred_check_branch
          %575 = sbr.rel (%p573) target = $region76
        $region75: #{tdvae_reconstruct.1} parent=11 // pred_region
          _
        $region76: #{tdvae_reconstruct.1} parent=11 // pred_fallthru
          _
      $region12: #{tdvae_reconstruct.1} parent=5 // pred_fallthru
        _
      %p576 = scmp.lt.s32.totalorder %s31, 2
      // Predicated region
      $region77: #{tdvae_reconstruct.1} parent=5 // pred_check
        %p577 = pneg %p576
      $region78: #{tdvae_reconstruct.1} parent=5 // pred_check_branch
        %579 = sbr.rel (%p577) target = $region80
      $region79: #{tdvae_reconstruct.1} parent=5 // pred_region
        // Predicated region
        $region81: #{tdvae_reconstruct.1} parent=79 // pred_check
          %p580 = pneg %p51
        $region82: #{tdvae_reconstruct.1} parent=79 // pred_check_branch
          %582 = sbr.rel (%p580) target = $region84
        $region83: #{tdvae_reconstruct.1} parent=79 // pred_region
          %s583 = smul.u32 4, %s31
          %p584 = scmp.lt.s32.totalorder %s583, 7
          %s585 = scalar_select %p584, %s583, 7
          %s586 = smul.addr %s585, 4
          %s587 = scalar_lea.vmem %s0, %s586
          %s588 = smul.u32 4, %s31
        $region84: #{tdvae_reconstruct.1} parent=79 // pred_fallthru
          _
        // Predicated region
        $region85: #{tdvae_reconstruct.1} parent=79 // pred_check
          %p589 = pneg %p77
        $region86: #{tdvae_reconstruct.1} parent=79 // pred_check_branch
          %591 = sbr.rel (%p589) target = $region88
        $region87: #{tdvae_reconstruct.1} parent=79 // pred_region
          %s592 = smul.u32 4, %s31
          %p593 = scmp.lt.s32.totalorder %s592, 7
          %s594 = scalar_select %p593, %s592, 7
          %s595 = smul.addr %s594, 2
          %s596 = smul.addr %s595, 8
          %s597 = scalar_lea.vmem %s1, %s596
          %s598 = smul.u32 4, %s31
        $region88: #{tdvae_reconstruct.1} parent=79 // pred_fallthru
          _
      $region80: #{tdvae_reconstruct.1} parent=5 // pred_fallthru
        _
      %p599 = scmp.le.s32.totalorder 1, %s31
      %p600 = scmp.lt.s32.totalorder %s31, 3
      %p601 = pnand %p599, %p600
      %p602 = pneg %p601
      // Predicated region
      $region89: #{tdvae_reconstruct.1} parent=5 // pred_check
        _
      $region90: #{tdvae_reconstruct.1} parent=5 // pred_check_branch
        %604 = sbr.rel (%p601) target = $region92
      $region91: #{tdvae_reconstruct.1} parent=5 // pred_region
        %s605 = ssub.s32 %s31, 1
        // Predicated region
        $region93: #{tdvae_reconstruct.1} parent=91 // pred_check
          %p606 = pneg %p104
        $region94: #{tdvae_reconstruct.1} parent=91 // pred_check_branch
          %608 = sbr.rel (%p606) target = $region96
        $region95: #{tdvae_reconstruct.1} parent=91 // pred_region
          %609 = dma.done [#allocation3], 2048
        $region96: #{tdvae_reconstruct.1} parent=91 // pred_fallthru
          _
        // Predicated region
        $region97: #{tdvae_reconstruct.1} parent=91 // pred_check
          %p610 = pneg %p146
        $region98: #{tdvae_reconstruct.1} parent=91 // pred_check_branch
          %612 = sbr.rel (%p610) target = $region100
        $region99: #{tdvae_reconstruct.1} parent=91 // pred_region
          %613 = dma.done [#allocation6], 2048
        $region100: #{tdvae_reconstruct.1} parent=91 // pred_fallthru
          _
        // Predicated region
        $region101: #{tdvae_reconstruct.1} parent=91 // pred_check
          %p614 = pneg %p167
        $region102: #{tdvae_reconstruct.1} parent=91 // pred_check_branch
          %616 = sbr.rel (%p614) target = $region104
        $region103: #{tdvae_reconstruct.1} parent=91 // pred_region
          %617 = dma.done [#allocation6], 32
        $region104: #{tdvae_reconstruct.1} parent=91 // pred_fallthru
          _
        // Predicated region
        $region105: #{tdvae_reconstruct.1} parent=91 // pred_check
          %p618 = pneg %p209
        $region106: #{tdvae_reconstruct.1} parent=91 // pred_check_branch
          %620 = sbr.rel (%p618) target = $region108
        $region107: #{tdvae_reconstruct.1} parent=91 // pred_region
          %621 = dma.done [#allocation9], 2048
        $region108: #{tdvae_reconstruct.1} parent=91 // pred_fallthru
          _
        // Predicated region
        $region109: #{tdvae_reconstruct.1} parent=91 // pred_check
          %p622 = pneg %p251
        $region110: #{tdvae_reconstruct.1} parent=91 // pred_check_branch
          %624 = sbr.rel (%p622) target = $region112
        $region111: #{tdvae_reconstruct.1} parent=91 // pred_region
          %625 = dma.done [#allocation9], 2048
        $region112: #{tdvae_reconstruct.1} parent=91 // pred_fallthru
          _
        // Predicated region
        $region113: #{tdvae_reconstruct.1} parent=91 // pred_check
          %p626 = pneg %p293
        $region114: #{tdvae_reconstruct.1} parent=91 // pred_check_branch
          %628 = sbr.rel (%p626) target = $region116
        $region115: #{tdvae_reconstruct.1} parent=91 // pred_region
          %629 = dma.done [#allocation12], 2048
        $region116: #{tdvae_reconstruct.1} parent=91 // pred_fallthru
          _
        // Predicated region
        $region117: #{tdvae_reconstruct.1} parent=91 // pred_check
          %p630 = pneg %p314
        $region118: #{tdvae_reconstruct.1} parent=91 // pred_check_branch
          %632 = sbr.rel (%p630) target = $region120
        $region119: #{tdvae_reconstruct.1} parent=91 // pred_region
          %633 = dma.done [#allocation12], 2048
        $region120: #{tdvae_reconstruct.1} parent=91 // pred_fallthru
          _
        %s634 = smul.u32 4, %s36
        %p635 = scmp.lt.s32.totalorder %s634, 7
        %s636 = scalar_select %p635, %s634, 7
        %s637 = smul.addr %s636, 4
        %s638 = scalar_lea.vmem %s0, %s637
        %p639 = pneg %p57
        %p640 = pneg %p54
        %s641 = smul.u32 4, %s36
        %p642 = scmp.lt.s32.totalorder %s641, 7
        %s643 = scalar_select %p642, %s641, 7
        %s644 = smul.addr %s643, 2
        %s645 = smul.addr %s644, 8
        %s646 = scalar_lea.vmem %s1, %s645
        %p647 = pneg %p83
        %p648 = pneg %p80
        %p649 = pneg %p104
        %p650 = pneg %p101
        %p651 = pneg %p125
        %p652 = pneg %p122
        %p653 = pneg %p146
        %p654 = pneg %p143
        %p655 = pneg %p167
        %p656 = pneg %p164
        %p657 = pneg %p188
        %p658 = pneg %p185
        %p659 = pneg %p209
        %p660 = pneg %p206
        %p661 = pneg %p230
        %p662 = pneg %p227
        %p663 = pneg %p251
        %p664 = pneg %p248
        %p665 = pneg %p272
        %p666 = pneg %p269
        %p667 = pneg %p293
        %p668 = pneg %p290
        %p669 = pneg %p314
        %p670 = pneg %p311
        %p671 = pneg %p335
        %p672 = pneg %p332
        %p673 = pneg %p356
        %p674 = pneg %p353
        %p675 = pneg %p377
        %p676 = pneg %p374
        %p677 = pneg %p398
        %p678 = pneg %p395
        %p679 = pneg %p419
        %p680 = pneg %p416
        %p681 = pneg %p445
        %p682 = pneg %p442
        %s683 = sand.u32 %s432, 1
        %s684 = scalar_lea.sflag [#allocation4], %s683
        %s685 = sand.u32 %s432, 1
        %s686 = smul.addr %s685, 64
        %s687 = scalar_lea.vmem [#allocation14], %s686
        %s688 = smul.u32 4, %s36
        %p689 = scmp.lt.s32.totalorder %s688, 7
        %s690 = scalar_select %p689, %s688, 7
        %s691 = smul.addr %s690, 4
        %s692 = scalar_lea.vmem %s0, %s691
        %s693 = smul.u32 4, %s36
        %s694 = smul.u32 4, %s36
        %p695 = scmp.lt.s32.totalorder %s694, 7
        %s696 = scalar_select %p695, %s694, 7
        %s697 = smul.addr %s696, 2
        %s698 = smul.addr %s697, 8
        %s699 = scalar_lea.vmem %s1, %s698
        %s700 = smul.u32 4, %s36
        %s701 = smul.u32 4, %s36
        %v703 = vld [vmem:[%s692] sm:$0xf]
        %v704 = vld [vmem:[%s692 + $0x4] sm:$0xf]
        %v705 = vld [vmem:[%s692 + $0x8] sm:$0xf]
        %v706 = vld [vmem:[%s692 + $0xc] sm:$0xf]
        %v707 = vld [vmem:[%s699] sm:$0xff]
        %v708 = vld [vmem:[%s699 + $0x8] sm:$0xff]
        %v709 = vld [vmem:[%s699 + $0x10] sm:$0xff]
        %v710 = vld [vmem:[%s699 + $0x18] sm:$0xff]
        %v711 = vld [vmem:[%s699 + $0x20] sm:$0xff]
        %v712 = vld [vmem:[%s699 + $0x28] sm:$0xff]
        %v713 = vld [vmem:[%s699 + $0x30] sm:$0xff]
        %v714 = vld [vmem:[%s699 + $0x38] sm:$0xff]
        %v715 = vld [vmem:[#allocation2] sm:$0xff]
        %v716 = vld [vmem:[#allocation2 + $0x8] sm:$0xff]
        %v717 = vld [vmem:[#allocation2 + $0x10] sm:$0xff]
        %v718 = vld [vmem:[#allocation2 + $0x18] sm:$0xff]
        %v719 = vld [vmem:[#allocation2 + $0x20] sm:$0xff]
        %v720 = vld [vmem:[#allocation2 + $0x28] sm:$0xff]
        %v721 = vld [vmem:[#allocation2 + $0x30] sm:$0xff]
        %v722 = vld [vmem:[#allocation2 + $0x38] sm:$0xff]
        %v723 = vld [vmem:[#allocation2 + $0x40] sm:$0xff]
        %v724 = vld [vmem:[#allocation2 + $0x48] sm:$0xff]
        %v725 = vld [vmem:[#allocation2 + $0x50] sm:$0xff]
        %v726 = vld [vmem:[#allocation2 + $0x58] sm:$0xff]
        %v727 = vld [vmem:[#allocation2 + $0x60] sm:$0xff]
        %v728 = vld [vmem:[#allocation2 + $0x68] sm:$0xff]
        %v729 = vld [vmem:[#allocation2 + $0x70] sm:$0xff]
        %v730 = vld [vmem:[#allocation2 + $0x78] sm:$0xff]
        %v731 = vld [vmem:[%s3] sm:$0x3]
        %v733 = vlaneseq
        %v734 = vshrl.u32 %v733, 7
        %v735 = vsub.s32 0, %v734
        %v736 = vrot.slane %v731, %v735
        %v737 = vlaneseq
        %v738 = vshrl.u32 %v737, 7
        %v739 = vsub.s32 1, %v738
        %v740 = vrot.slane %v731, %v739
        %v747 = vunpack.c.l.b16 %v703
        %v748 = vunpack.c.l.b16 %v704
        %v749 = vunpack.c.l.b16 %v705
        %v750 = vunpack.c.l.b16 %v706
        %v751 = vpack.c.b16 %v748, %v747
        %v752 = vpack.c.b16 %v750, %v749
        %v771 = vunpack.c.l.b16 %v715
        %v772 = vunpack.c.h.b16 %v715
        %v773 = vunpack.c.l.b16 %v716
        %v774 = vunpack.c.h.b16 %v716
        %v775 = vunpack.c.l.b16 %v717
        %v776 = vunpack.c.h.b16 %v717
        %v777 = vunpack.c.l.b16 %v718
        %v778 = vunpack.c.h.b16 %v718
        %v779 = vunpack.c.l.b16 %v719
        %v780 = vunpack.c.h.b16 %v719
        %v781 = vunpack.c.l.b16 %v720
        %v782 = vunpack.c.h.b16 %v720
        %v783 = vunpack.c.l.b16 %v721
        %v784 = vunpack.c.h.b16 %v721
        %v785 = vunpack.c.l.b16 %v722
        %v786 = vunpack.c.h.b16 %v722
        %v787 = vunpack.c.l.b16 %v723
        %v788 = vunpack.c.h.b16 %v723
        %v789 = vunpack.c.l.b16 %v724
        %v790 = vunpack.c.h.b16 %v724
        %v791 = vunpack.c.l.b16 %v725
        %v792 = vunpack.c.h.b16 %v725
        %v793 = vunpack.c.l.b16 %v726
        %v794 = vunpack.c.h.b16 %v726
        %v795 = vunpack.c.l.b16 %v727
        %v796 = vunpack.c.h.b16 %v727
        %v797 = vunpack.c.l.b16 %v728
        %v798 = vunpack.c.h.b16 %v728
        %v799 = vunpack.c.l.b16 %v729
        %v800 = vunpack.c.h.b16 %v729
        %v801 = vunpack.c.l.b16 %v730
        %v802 = vunpack.c.h.b16 %v730
        %v803 = vpack.c.b16 %v773, %v771
        %v804 = vpack.c.b16 %v774, %v772
        %v805 = vpack.c.b16 %v777, %v775
        %v806 = vpack.c.b16 %v778, %v776
        %v807 = vpack.c.b16 %v781, %v779
        %v808 = vpack.c.b16 %v782, %v780
        %v809 = vpack.c.b16 %v785, %v783
        %v810 = vpack.c.b16 %v786, %v784
        %v811 = vpack.c.b16 %v789, %v787
        %v812 = vpack.c.b16 %v790, %v788
        %v813 = vpack.c.b16 %v793, %v791
        %v814 = vpack.c.b16 %v794, %v792
        %v815 = vpack.c.b16 %v797, %v795
        %v816 = vpack.c.b16 %v798, %v796
        %v817 = vpack.c.b16 %v801, %v799
        %v818 = vpack.c.b16 %v802, %v800
        %835 = vmatprep.subr.bf16.mxu0 %v804
        %836 = vmatpush1.bf16.msra.mxu0 %v803
        %837 = vmatprep.subr.bf16.mxu0 %v806
        %838 = vmatpush1.bf16.msra.mxu0 %v805
        %839 = vmatprep.subr.bf16.mxu0 %v808
        %840 = vmatpush1.bf16.msra.mxu0 %v807
        %841 = vmatprep.subr.bf16.mxu0 %v810
        %842 = vmatpush1.bf16.msra.mxu0 %v809
        %843 = vmatprep.subr.bf16.mxu0 %v812
        %844 = vmatpush1.bf16.msra.mxu0 %v811
        %845 = vmatprep.subr.bf16.mxu0 %v814
        %846 = vmatpush1.bf16.msra.mxu0 %v813
        %847 = vmatprep.subr.bf16.mxu0 %v816
        %848 = vmatpush1.bf16.msra.mxu0 %v815
        %849 = vmatprep.subr.bf16.mxu0 %v818
        %850 = vmatpush1.bf16.msra.mxu0 %v817
        %851 = vmatprep.subr.bf16.mxu0 0
        %852 = vmatpush1.bf16.msra.mxu0 0
        %853 = vmatprep.subr.bf16.mxu0 0
        %854 = vmatpush1.bf16.msra.mxu0 0
        %855 = vmatprep.subr.bf16.mxu0 0
        %856 = vmatpush1.bf16.msra.mxu0 0
        %857 = vmatprep.subr.bf16.mxu0 0
        %858 = vmatpush1.bf16.msra.mxu0 0
        %859 = vmatprep.subr.bf16.mxu0 0
        %860 = vmatpush1.bf16.msra.mxu0 0
        %861 = vmatprep.subr.bf16.mxu0 0
        %862 = vmatpush1.bf16.msra.mxu0 0
        %863 = vmatprep.subr.bf16.mxu0 0
        %864 = vmatpush1.bf16.msra.mxu0 0
        %865 = vmatprep.subr.bf16.mxu0 0
        %866 = vmatpush1.bf16.msra.mxu0 0
        %867 = vmatprep.mubr.bf16.mxu0 0
        %868 = vmatmul.mubr.bf16.gmra.mrb[0].mxu0 %v751
        %v869 = vpop.f32.mrb[0].mxu0
        %v870 = vadd.f32 %v736, %v869
        %v871 = vpop.f32.mrb[0].mxu0
        %v872 = vadd.f32 %v740, %v871
        %v873 = vpop.f32.mrb[0].mxu0
        %v874 = vadd.f32 %v736, %v873
        %v875 = vpop.f32.mrb[0].mxu0
        %v876 = vadd.f32 %v740, %v875
        %877 = vmatprep.mubr.bf16.mxu0 0
        %878 = vmatmul.mubr.bf16.gmra.mrb[0].mxu0 %v752
        %v879 = vpop.f32.mrb[0].mxu0
        %v880 = vadd.f32 %v736, %v879
        %v881 = vpop.f32.mrb[0].mxu0
        %v882 = vadd.f32 %v740, %v881
        %v883 = vpop.f32.mrb[0].mxu0
        %v884 = vadd.f32 %v736, %v883
        %v885 = vpop.f32.mrb[0].mxu0
        %v886 = vadd.f32 %v740, %v885
        %887 = vdwg.mxu0
        %v888 = vtanh.pop %v870
        %v889 = vtanh.pop %v874
        %v890 = vtanh.pop %v880
        %v891 = vtanh.pop %v884
        %v892 = vmul.f32 %v872, 0.5
        %v893 = vmul.f32 %v876, 0.5
        %v894 = vmul.f32 %v882, 0.5
        %v895 = vmul.f32 %v886, 0.5
        %v896 = vtanh.pop %v892
        %v897 = vtanh.pop %v893
        %v898 = vtanh.pop %v894
        %v899 = vtanh.pop %v895
        %v900 = vadd.f32 %v896, 1.0
        %v901 = vadd.f32 %v897, 1.0
        %v902 = vadd.f32 %v898, 1.0
        %v903 = vadd.f32 %v899, 1.0
        %v904 = vmul.f32 %v900, 0.5
        %v905 = vmul.f32 %v901, 0.5
        %v906 = vmul.f32 %v902, 0.5
        %v907 = vmul.f32 %v903, 0.5
        %v908 = vmul.f32 %v888, %v904
        %v909 = vmul.f32 %v889, %v905
        %v910 = vmul.f32 %v890, %v906
        %v911 = vmul.f32 %v891, %v907
        %v912 = vpack.c.bf16 %v909, %v908
        %v913 = vpack.c.bf16 %v911, %v910
        %v914 = vld [vmem:[#allocation5] sm:$0xff]
        %v915 = vld [vmem:[#allocation5 + $0x8] sm:$0xff]
        %v916 = vld [vmem:[#allocation5 + $0x10] sm:$0xff]
        %v917 = vld [vmem:[#allocation5 + $0x18] sm:$0xff]
        %v918 = vld [vmem:[#allocation5 + $0x20] sm:$0xff]
        %v919 = vld [vmem:[#allocation5 + $0x28] sm:$0xff]
        %v920 = vld [vmem:[#allocation5 + $0x30] sm:$0xff]
        %v921 = vld [vmem:[#allocation5 + $0x38] sm:$0xff]
        %v922 = vld [vmem:[#allocation5 + $0x40] sm:$0xff]
        %v923 = vld [vmem:[#allocation5 + $0x48] sm:$0xff]
        %v924 = vld [vmem:[#allocation5 + $0x50] sm:$0xff]
        %v925 = vld [vmem:[#allocation5 + $0x58] sm:$0xff]
        %v926 = vld [vmem:[#allocation5 + $0x60] sm:$0xff]
        %v927 = vld [vmem:[#allocation5 + $0x68] sm:$0xff]
        %v928 = vld [vmem:[#allocation5 + $0x70] sm:$0xff]
        %v929 = vld [vmem:[#allocation5 + $0x78] sm:$0xff]
        %v930 = vld [vmem:[#allocation7] sm:$0x3]
        %v932 = vlaneseq
        %v933 = vshrl.u32 %v932, 7
        %v934 = vsub.s32 0, %v933
        %v935 = vrot.slane %v930, %v934
        %v936 = vlaneseq
        %v937 = vshrl.u32 %v936, 7
        %v938 = vsub.s32 1, %v937
        %v939 = vrot.slane %v930, %v938
        %v958 = vunpack.c.l.b16 %v914
        %v959 = vunpack.c.h.b16 %v914
        %v960 = vunpack.c.l.b16 %v915
        %v961 = vunpack.c.h.b16 %v915
        %v962 = vunpack.c.l.b16 %v916
        %v963 = vunpack.c.h.b16 %v916
        %v964 = vunpack.c.l.b16 %v917
        %v965 = vunpack.c.h.b16 %v917
        %v966 = vunpack.c.l.b16 %v918
        %v967 = vunpack.c.h.b16 %v918
        %v968 = vunpack.c.l.b16 %v919
        %v969 = vunpack.c.h.b16 %v919
        %v970 = vunpack.c.l.b16 %v920
        %v971 = vunpack.c.h.b16 %v920
        %v972 = vunpack.c.l.b16 %v921
        %v973 = vunpack.c.h.b16 %v921
        %v974 = vunpack.c.l.b16 %v922
        %v975 = vunpack.c.h.b16 %v922
        %v976 = vunpack.c.l.b16 %v923
        %v977 = vunpack.c.h.b16 %v923
        %v978 = vunpack.c.l.b16 %v924
        %v979 = vunpack.c.h.b16 %v924
        %v980 = vunpack.c.l.b16 %v925
        %v981 = vunpack.c.h.b16 %v925
        %v982 = vunpack.c.l.b16 %v926
        %v983 = vunpack.c.h.b16 %v926
        %v984 = vunpack.c.l.b16 %v927
        %v985 = vunpack.c.h.b16 %v927
        %v986 = vunpack.c.l.b16 %v928
        %v987 = vunpack.c.h.b16 %v928
        %v988 = vunpack.c.l.b16 %v929
        %v989 = vunpack.c.h.b16 %v929
        %v990 = vpack.c.b16 %v960, %v958
        %v991 = vpack.c.b16 %v961, %v959
        %v992 = vpack.c.b16 %v964, %v962
        %v993 = vpack.c.b16 %v965, %v963
        %v994 = vpack.c.b16 %v968, %v966
        %v995 = vpack.c.b16 %v969, %v967
        %v996 = vpack.c.b16 %v972, %v970
        %v997 = vpack.c.b16 %v973, %v971
        %v998 = vpack.c.b16 %v976, %v974
        %v999 = vpack.c.b16 %v977, %v975
        %v1000 = vpack.c.b16 %v980, %v978
        %v1001 = vpack.c.b16 %v981, %v979
        %v1002 = vpack.c.b16 %v984, %v982
        %v1003 = vpack.c.b16 %v985, %v983
        %v1004 = vpack.c.b16 %v988, %v986
        %v1005 = vpack.c.b16 %v989, %v987
        %1022 = vmatprep.subr.bf16.mxu0 %v991
        %1023 = vmatpush1.bf16.msra.mxu0 %v990
        %1024 = vmatprep.subr.bf16.mxu0 %v993
        %1025 = vmatpush1.bf16.msra.mxu0 %v992
        %1026 = vmatprep.subr.bf16.mxu0 %v995
        %1027 = vmatpush1.bf16.msra.mxu0 %v994
        %1028 = vmatprep.subr.bf16.mxu0 %v997
        %1029 = vmatpush1.bf16.msra.mxu0 %v996
        %1030 = vmatprep.subr.bf16.mxu0 %v999
        %1031 = vmatpush1.bf16.msra.mxu0 %v998
        %1032 = vmatprep.subr.bf16.mxu0 %v1001
        %1033 = vmatpush1.bf16.msra.mxu0 %v1000
        %1034 = vmatprep.subr.bf16.mxu0 %v1003
        %1035 = vmatpush1.bf16.msra.mxu0 %v1002
        %1036 = vmatprep.subr.bf16.mxu0 %v1005
        %1037 = vmatpush1.bf16.msra.mxu0 %v1004
        %1038 = vmatprep.subr.bf16.mxu0 0
        %1039 = vmatpush1.bf16.msra.mxu0 0
        %1040 = vmatprep.subr.bf16.mxu0 0
        %1041 = vmatpush1.bf16.msra.mxu0 0
        %1042 = vmatprep.subr.bf16.mxu0 0
        %1043 = vmatpush1.bf16.msra.mxu0 0
        %1044 = vmatprep.subr.bf16.mxu0 0
        %1045 = vmatpush1.bf16.msra.mxu0 0
        %1046 = vmatprep.subr.bf16.mxu0 0
        %1047 = vmatpush1.bf16.msra.mxu0 0
        %1048 = vmatprep.subr.bf16.mxu0 0
        %1049 = vmatpush1.bf16.msra.mxu0 0
        %1050 = vmatprep.subr.bf16.mxu0 0
        %1051 = vmatpush1.bf16.msra.mxu0 0
        %1052 = vmatprep.subr.bf16.mxu0 0
        %1053 = vmatpush1.bf16.msra.mxu0 0
        %1054 = vmatprep.mubr.bf16.mxu0 0
        %1055 = vmatmul.mubr.bf16.gmra.mrb[0].mxu0 %v912
        %v1056 = vpop.f32.mrb[0].mxu0
        %v1057 = vadd.f32 %v935, %v1056
        %v1058 = vpop.f32.mrb[0].mxu0
        %v1059 = vadd.f32 %v939, %v1058
        %v1060 = vpop.f32.mrb[0].mxu0
        %v1061 = vadd.f32 %v935, %v1060
        %v1062 = vpop.f32.mrb[0].mxu0
        %v1063 = vadd.f32 %v939, %v1062
        %1064 = vmatprep.mubr.bf16.mxu0 0
        %1065 = vmatmul.mubr.bf16.gmra.mrb[0].mxu0 %v913
        %v1066 = vpop.f32.mrb[0].mxu0
        %v1067 = vadd.f32 %v935, %v1066
        %v1068 = vpop.f32.mrb[0].mxu0
        %v1069 = vadd.f32 %v939, %v1068
        %v1070 = vpop.f32.mrb[0].mxu0
        %v1071 = vadd.f32 %v935, %v1070
        %v1072 = vpop.f32.mrb[0].mxu0
        %v1073 = vadd.f32 %v939, %v1072
        %1074 = vdwg.mxu0
        %v1075 = vmul.f32 %v1059, 1.442695
        %v1076 = vpow.pop %v1075
        %v1077 = vmul.f32 %v1063, 1.442695
        %v1078 = vpow.pop %v1077
        %v1079 = vmul.f32 %v1069, 1.442695
        %v1080 = vpow.pop %v1079
        %v1081 = vmul.f32 %v1073, 1.442695
        %v1082 = vpow.pop %v1081
        %v1083 = vmul.f32 %v1076, %v707
        %v1084 = vmul.f32 %v1078, %v709
        %v1085 = vmul.f32 %v1080, %v711
        %v1086 = vmul.f32 %v1082, %v713
        %v1087 = vadd.f32 %v1057, %v1083
        %v1088 = vadd.f32 %v1061, %v1084
        %v1089 = vadd.f32 %v1067, %v1085
        %v1090 = vadd.f32 %v1071, %v1086
        %v1091 = vpack.c.bf16 %v1088, %v1087
        %v1092 = vpack.c.bf16 %v1090, %v1089
        %v1093 = vld [vmem:[%s6] sm:$0xff]
        %v1094 = vld [vmem:[%s6 + $0x8] sm:$0xff]
        %v1095 = vld [vmem:[%s6 + $0x10] sm:$0xff]
        %v1096 = vld [vmem:[%s6 + $0x18] sm:$0xff]
        %v1097 = vld [vmem:[%s6 + $0x20] sm:$0xff]
        %v1098 = vld [vmem:[%s6 + $0x28] sm:$0xff]
        %v1099 = vld [vmem:[%s6 + $0x30] sm:$0xff]
        %v1100 = vld [vmem:[%s6 + $0x38] sm:$0xff]
        %v1101 = vld [vmem:[%s6 + $0x40] sm:$0xff]
        %v1102 = vld [vmem:[%s6 + $0x48] sm:$0xff]
        %v1103 = vld [vmem:[%s6 + $0x50] sm:$0xff]
        %v1104 = vld [vmem:[%s6 + $0x58] sm:$0xff]
        %v1105 = vld [vmem:[%s6 + $0x60] sm:$0xff]
        %v1106 = vld [vmem:[%s6 + $0x68] sm:$0xff]
        %v1107 = vld [vmem:[%s6 + $0x70] sm:$0xff]
        %v1108 = vld [vmem:[%s6 + $0x78] sm:$0xff]
        %v1109 = vld [vmem:[#allocation8] sm:$0xff]
        %v1110 = vld [vmem:[#allocation8 + $0x8] sm:$0xff]
        %v1111 = vld [vmem:[#allocation8 + $0x10] sm:$0xff]
        %v1112 = vld [vmem:[#allocation8 + $0x18] sm:$0xff]
        %v1113 = vld [vmem:[#allocation8 + $0x20] sm:$0xff]
        %v1114 = vld [vmem:[#allocation8 + $0x28] sm:$0xff]
        %v1115 = vld [vmem:[#allocation8 + $0x30] sm:$0xff]
        %v1116 = vld [vmem:[#allocation8 + $0x38] sm:$0xff]
        %v1117 = vld [vmem:[#allocation8 + $0x40] sm:$0xff]
        %v1118 = vld [vmem:[#allocation8 + $0x48] sm:$0xff]
        %v1119 = vld [vmem:[#allocation8 + $0x50] sm:$0xff]
        %v1120 = vld [vmem:[#allocation8 + $0x58] sm:$0xff]
        %v1121 = vld [vmem:[#allocation8 + $0x60] sm:$0xff]
        %v1122 = vld [vmem:[#allocation8 + $0x68] sm:$0xff]
        %v1123 = vld [vmem:[#allocation8 + $0x70] sm:$0xff]
        %v1124 = vld [vmem:[#allocation8 + $0x78] sm:$0xff]
        %v1141 = vunpack.c.l.b16 %v1109
        %v1142 = vunpack.c.h.b16 %v1109
        %v1143 = vunpack.c.l.b16 %v1110
        %v1144 = vunpack.c.h.b16 %v1110
        %v1145 = vunpack.c.l.b16 %v1111
        %v1146 = vunpack.c.h.b16 %v1111
        %v1147 = vunpack.c.l.b16 %v1112
        %v1148 = vunpack.c.h.b16 %v1112
        %v1149 = vunpack.c.l.b16 %v1113
        %v1150 = vunpack.c.h.b16 %v1113
        %v1151 = vunpack.c.l.b16 %v1114
        %v1152 = vunpack.c.h.b16 %v1114
        %v1153 = vunpack.c.l.b16 %v1115
        %v1154 = vunpack.c.h.b16 %v1115
        %v1155 = vunpack.c.l.b16 %v1116
        %v1156 = vunpack.c.h.b16 %v1116
        %v1157 = vunpack.c.l.b16 %v1117
        %v1158 = vunpack.c.h.b16 %v1117
        %v1159 = vunpack.c.l.b16 %v1118
        %v1160 = vunpack.c.h.b16 %v1118
        %v1161 = vunpack.c.l.b16 %v1119
        %v1162 = vunpack.c.h.b16 %v1119
        %v1163 = vunpack.c.l.b16 %v1120
        %v1164 = vunpack.c.h.b16 %v1120
        %v1165 = vunpack.c.l.b16 %v1121
        %v1166 = vunpack.c.h.b16 %v1121
        %v1167 = vunpack.c.l.b16 %v1122
        %v1168 = vunpack.c.h.b16 %v1122
        %v1169 = vunpack.c.l.b16 %v1123
        %v1170 = vunpack.c.h.b16 %v1123
        %v1171 = vunpack.c.l.b16 %v1124
        %v1172 = vunpack.c.h.b16 %v1124
        %v1173 = vpack.c.b16 %v1143, %v1141
        %v1174 = vpack.c.b16 %v1144, %v1142
        %v1175 = vpack.c.b16 %v1147, %v1145
        %v1176 = vpack.c.b16 %v1148, %v1146
        %v1177 = vpack.c.b16 %v1151, %v1149
        %v1178 = vpack.c.b16 %v1152, %v1150
        %v1179 = vpack.c.b16 %v1155, %v1153
        %v1180 = vpack.c.b16 %v1156, %v1154
        %v1181 = vpack.c.b16 %v1159, %v1157
        %v1182 = vpack.c.b16 %v1160, %v1158
        %v1183 = vpack.c.b16 %v1163, %v1161
        %v1184 = vpack.c.b16 %v1164, %v1162
        %v1185 = vpack.c.b16 %v1167, %v1165
        %v1186 = vpack.c.b16 %v1168, %v1166
        %v1187 = vpack.c.b16 %v1171, %v1169
        %v1188 = vpack.c.b16 %v1172, %v1170
        %1205 = vmatprep.subr.bf16.mxu0 %v1174
        %1206 = vmatpush1.bf16.msra.mxu0 %v1173
        %1207 = vmatprep.subr.bf16.mxu0 %v1176
        %1208 = vmatpush1.bf16.msra.mxu0 %v1175
        %1209 = vmatprep.subr.bf16.mxu0 %v1178
        %1210 = vmatpush1.bf16.msra.mxu0 %v1177
        %1211 = vmatprep.subr.bf16.mxu0 %v1180
        %1212 = vmatpush1.bf16.msra.mxu0 %v1179
        %1213 = vmatprep.subr.bf16.mxu0 %v1182
        %1214 = vmatpush1.bf16.msra.mxu0 %v1181
        %1215 = vmatprep.subr.bf16.mxu0 %v1184
        %1216 = vmatpush1.bf16.msra.mxu0 %v1183
        %1217 = vmatprep.subr.bf16.mxu0 %v1186
        %1218 = vmatpush1.bf16.msra.mxu0 %v1185
        %1219 = vmatprep.subr.bf16.mxu0 %v1188
        %1220 = vmatpush1.bf16.msra.mxu0 %v1187
        %1221 = vmatprep.subr.bf16.mxu0 0
        %1222 = vmatpush1.bf16.msra.mxu0 0
        %1223 = vmatprep.subr.bf16.mxu0 0
        %1224 = vmatpush1.bf16.msra.mxu0 0
        %1225 = vmatprep.subr.bf16.mxu0 0
        %1226 = vmatpush1.bf16.msra.mxu0 0
        %1227 = vmatprep.subr.bf16.mxu0 0
        %1228 = vmatpush1.bf16.msra.mxu0 0
        %1229 = vmatprep.subr.bf16.mxu0 0
        %1230 = vmatpush1.bf16.msra.mxu0 0
        %1231 = vmatprep.subr.bf16.mxu0 0
        %1232 = vmatpush1.bf16.msra.mxu0 0
        %1233 = vmatprep.subr.bf16.mxu0 0
        %1234 = vmatpush1.bf16.msra.mxu0 0
        %1235 = vmatprep.subr.bf16.mxu0 0
        %1236 = vmatpush1.bf16.msra.mxu0 0
        %1237 = vmatprep.mubr.bf16.mxu0 0
        %1238 = vmatmul.mubr.bf16.gmra.mrb[0].mxu0 %v1091
        %v1239 = vpop.f32.mrb[0].mxu0
        %v1240 = vadd.f32 0.0, %v1239
        %v1241 = vpop.f32.mrb[0].mxu0
        %v1242 = vadd.f32 0.0, %v1241
        %v1243 = vpop.f32.mrb[0].mxu0
        %v1244 = vadd.f32 0.0, %v1243
        %v1245 = vpop.f32.mrb[0].mxu0
        %v1246 = vadd.f32 0.0, %v1245
        %1247 = vmatprep.mubr.bf16.mxu0 0
        %1248 = vmatmul.mubr.bf16.gmra.mrb[0].mxu0 %v1092
        %v1249 = vpop.f32.mrb[0].mxu0
        %v1250 = vadd.f32 0.0, %v1249
        %v1251 = vpop.f32.mrb[0].mxu0
        %v1252 = vadd.f32 0.0, %v1251
        %v1253 = vpop.f32.mrb[0].mxu0
        %v1254 = vadd.f32 0.0, %v1253
        %v1255 = vpop.f32.mrb[0].mxu0
        %v1256 = vadd.f32 0.0, %v1255
        %1257 = vdwg.mxu0
        %v1274 = vunpack.c.l.b16 %v1093
        %v1275 = vunpack.c.h.b16 %v1093
        %v1276 = vunpack.c.l.b16 %v1094
        %v1277 = vunpack.c.h.b16 %v1094
        %v1278 = vunpack.c.l.b16 %v1095
        %v1279 = vunpack.c.h.b16 %v1095
        %v1280 = vunpack.c.l.b16 %v1096
        %v1281 = vunpack.c.h.b16 %v1096
        %v1282 = vunpack.c.l.b16 %v1097
        %v1283 = vunpack.c.h.b16 %v1097
        %v1284 = vunpack.c.l.b16 %v1098
        %v1285 = vunpack.c.h.b16 %v1098
        %v1286 = vunpack.c.l.b16 %v1099
        %v1287 = vunpack.c.h.b16 %v1099
        %v1288 = vunpack.c.l.b16 %v1100
        %v1289 = vunpack.c.h.b16 %v1100
        %v1290 = vunpack.c.l.b16 %v1101
        %v1291 = vunpack.c.h.b16 %v1101
        %v1292 = vunpack.c.l.b16 %v1102
        %v1293 = vunpack.c.h.b16 %v1102
        %v1294 = vunpack.c.l.b16 %v1103
        %v1295 = vunpack.c.h.b16 %v1103
        %v1296 = vunpack.c.l.b16 %v1104
        %v1297 = vunpack.c.h.b16 %v1104
        %v1298 = vunpack.c.l.b16 %v1105
        %v1299 = vunpack.c.h.b16 %v1105
        %v1300 = vunpack.c.l.b16 %v1106
        %v1301 = vunpack.c.h.b16 %v1106
        %v1302 = vunpack.c.l.b16 %v1107
        %v1303 = vunpack.c.h.b16 %v1107
        %v1304 = vunpack.c.l.b16 %v1108
        %v1305 = vunpack.c.h.b16 %v1108
        %v1306 = vpack.c.b16 %v1276, %v1274
        %v1307 = vpack.c.b16 %v1277, %v1275
        %v1308 = vpack.c.b16 %v1280, %v1278
        %v1309 = vpack.c.b16 %v1281, %v1279
        %v1310 = vpack.c.b16 %v1284, %v1282
        %v1311 = vpack.c.b16 %v1285, %v1283
        %v1312 = vpack.c.b16 %v1288, %v1286
        %v1313 = vpack.c.b16 %v1289, %v1287
        %v1314 = vpack.c.b16 %v1292, %v1290
        %v1315 = vpack.c.b16 %v1293, %v1291
        %v1316 = vpack.c.b16 %v1296, %v1294
        %v1317 = vpack.c.b16 %v1297, %v1295
        %v1318 = vpack.c.b16 %v1300, %v1298
        %v1319 = vpack.c.b16 %v1301, %v1299
        %v1320 = vpack.c.b16 %v1304, %v1302
        %v1321 = vpack.c.b16 %v1305, %v1303
        %1338 = vmatprep.subr.bf16.mxu0 %v1307
        %1339 = vmatpush1.bf16.msra.mxu0 %v1306
        %1340 = vmatprep.subr.bf16.mxu0 %v1309
        %1341 = vmatpush1.bf16.msra.mxu0 %v1308
        %1342 = vmatprep.subr.bf16.mxu0 %v1311
        %1343 = vmatpush1.bf16.msra.mxu0 %v1310
        %1344 = vmatprep.subr.bf16.mxu0 %v1313
        %1345 = vmatpush1.bf16.msra.mxu0 %v1312
        %1346 = vmatprep.subr.bf16.mxu0 %v1315
        %1347 = vmatpush1.bf16.msra.mxu0 %v1314
        %1348 = vmatprep.subr.bf16.mxu0 %v1317
        %1349 = vmatpush1.bf16.msra.mxu0 %v1316
        %1350 = vmatprep.subr.bf16.mxu0 %v1319
        %1351 = vmatpush1.bf16.msra.mxu0 %v1318
        %1352 = vmatprep.subr.bf16.mxu0 %v1321
        %1353 = vmatpush1.bf16.msra.mxu0 %v1320
        %1354 = vmatprep.subr.bf16.mxu0 0
        %1355 = vmatpush1.bf16.msra.mxu0 0
        %1356 = vmatprep.subr.bf16.mxu0 0
        %1357 = vmatpush1.bf16.msra.mxu0 0
        %1358 = vmatprep.subr.bf16.mxu0 0
        %1359 = vmatpush1.bf16.msra.mxu0 0
        %1360 = vmatprep.subr.bf16.mxu0 0
        %1361 = vmatpush1.bf16.msra.mxu0 0
        %1362 = vmatprep.subr.bf16.mxu0 0
        %1363 = vmatpush1.bf16.msra.mxu0 0
        %1364 = vmatprep.subr.bf16.mxu0 0
        %1365 = vmatpush1.bf16.msra.mxu0 0
        %1366 = vmatprep.subr.bf16.mxu0 0
        %1367 = vmatpush1.bf16.msra.mxu0 0
        %1368 = vmatprep.subr.bf16.mxu0 0
        %1369 = vmatpush1.bf16.msra.mxu0 0
        %1370 = vmatprep.mubr.bf16.mxu0 0
        %1371 = vmatmul.mubr.bf16.gmra.mrb[0].mxu0 %v751
        %v1372 = vpop.f32.mrb[0].mxu0
        %v1373 = vadd.f32 %v1240, %v1372
        %v1374 = vpop.f32.mrb[0].mxu0
        %v1375 = vadd.f32 %v1242, %v1374
        %v1376 = vpop.f32.mrb[0].mxu0
        %v1377 = vadd.f32 %v1244, %v1376
        %v1378 = vpop.f32.mrb[0].mxu0
        %v1379 = vadd.f32 %v1246, %v1378
        %1380 = vmatprep.mubr.bf16.mxu0 0
        %1381 = vmatmul.mubr.bf16.gmra.mrb[0].mxu0 %v752
        %v1382 = vpop.f32.mrb[0].mxu0
        %v1383 = vadd.f32 %v1250, %v1382
        %v1384 = vpop.f32.mrb[0].mxu0
        %v1385 = vadd.f32 %v1252, %v1384
        %v1386 = vpop.f32.mrb[0].mxu0
        %v1387 = vadd.f32 %v1254, %v1386
        %v1388 = vpop.f32.mrb[0].mxu0
        %v1389 = vadd.f32 %v1256, %v1388
        %1390 = vdwg.mxu0
        %v1391 = vld [vmem:[%s8] sm:$0x3]
        %v1393 = vlaneseq
        %v1394 = vshrl.u32 %v1393, 7
        %v1395 = vsub.s32 0, %v1394
        %v1396 = vrot.slane %v1391, %v1395
        %v1397 = vlaneseq
        %v1398 = vshrl.u32 %v1397, 7
        %v1399 = vsub.s32 1, %v1398
        %v1400 = vrot.slane %v1391, %v1399
        %v1403 = vadd.f32 %v1373, %v1396
        %v1404 = vadd.f32 %v1375, %v1400
        %v1405 = vadd.f32 %v1377, %v1396
        %v1406 = vadd.f32 %v1379, %v1400
        %v1407 = vadd.f32 %v1383, %v1396
        %v1408 = vadd.f32 %v1385, %v1400
        %v1409 = vadd.f32 %v1387, %v1396
        %v1410 = vadd.f32 %v1389, %v1400
        %v1411 = vtanh.pop %v1403
        %v1412 = vtanh.pop %v1405
        %v1413 = vtanh.pop %v1407
        %v1414 = vtanh.pop %v1409
        %v1415 = vmul.f32 %v1404, 0.5
        %v1416 = vmul.f32 %v1406, 0.5
        %v1417 = vmul.f32 %v1408, 0.5
        %v1418 = vmul.f32 %v1410, 0.5
        %v1419 = vtanh.pop %v1415
        %v1420 = vtanh.pop %v1416
        %v1421 = vtanh.pop %v1417
        %v1422 = vtanh.pop %v1418
        %v1423 = vadd.f32 %v1419, 1.0
        %v1424 = vadd.f32 %v1420, 1.0
        %v1425 = vadd.f32 %v1421, 1.0
        %v1426 = vadd.f32 %v1422, 1.0
        %v1427 = vmul.f32 %v1423, 0.5
        %v1428 = vmul.f32 %v1424, 0.5
        %v1429 = vmul.f32 %v1425, 0.5
        %v1430 = vmul.f32 %v1426, 0.5
        %v1431 = vmul.f32 %v1411, %v1427
        %v1432 = vmul.f32 %v1412, %v1428
        %v1433 = vmul.f32 %v1413, %v1429
        %v1434 = vmul.f32 %v1414, %v1430
        %v1435 = vpack.c.bf16 %v1432, %v1431
        %v1436 = vpack.c.bf16 %v1434, %v1433
        %v1437 = vld [vmem:[#allocation10] sm:$0xff]
        %v1438 = vld [vmem:[#allocation10 + $0x8] sm:$0xff]
        %v1439 = vld [vmem:[#allocation10 + $0x10] sm:$0xff]
        %v1440 = vld [vmem:[#allocation10 + $0x18] sm:$0xff]
        %v1441 = vld [vmem:[#allocation10 + $0x20] sm:$0xff]
        %v1442 = vld [vmem:[#allocation10 + $0x28] sm:$0xff]
        %v1443 = vld [vmem:[#allocation10 + $0x30] sm:$0xff]
        %v1444 = vld [vmem:[#allocation10 + $0x38] sm:$0xff]
        %v1445 = vld [vmem:[#allocation10 + $0x40] sm:$0xff]
        %v1446 = vld [vmem:[#allocation10 + $0x48] sm:$0xff]
        %v1447 = vld [vmem:[#allocation10 + $0x50] sm:$0xff]
        %v1448 = vld [vmem:[#allocation10 + $0x58] sm:$0xff]
        %v1449 = vld [vmem:[#allocation10 + $0x60] sm:$0xff]
        %v1450 = vld [vmem:[#allocation10 + $0x68] sm:$0xff]
        %v1451 = vld [vmem:[#allocation10 + $0x70] sm:$0xff]
        %v1452 = vld [vmem:[#allocation10 + $0x78] sm:$0xff]
        %v1453 = vld [vmem:[%s10] sm:$0x3]
        %v1455 = vlaneseq
        %v1456 = vshrl.u32 %v1455, 7
        %v1457 = vsub.s32 0, %v1456
        %v1458 = vrot.slane %v1453, %v1457
        %v1459 = vlaneseq
        %v1460 = vshrl.u32 %v1459, 7
        %v1461 = vsub.s32 1, %v1460
        %v1462 = vrot.slane %v1453, %v1461
        %v1481 = vunpack.c.l.b16 %v1437
        %v1482 = vunpack.c.h.b16 %v1437
        %v1483 = vunpack.c.l.b16 %v1438
        %v1484 = vunpack.c.h.b16 %v1438
        %v1485 = vunpack.c.l.b16 %v1439
        %v1486 = vunpack.c.h.b16 %v1439
        %v1487 = vunpack.c.l.b16 %v1440
        %v1488 = vunpack.c.h.b16 %v1440
        %v1489 = vunpack.c.l.b16 %v1441
        %v1490 = vunpack.c.h.b16 %v1441
        %v1491 = vunpack.c.l.b16 %v1442
        %v1492 = vunpack.c.h.b16 %v1442
        %v1493 = vunpack.c.l.b16 %v1443
        %v1494 = vunpack.c.h.b16 %v1443
        %v1495 = vunpack.c.l.b16 %v1444
        %v1496 = vunpack.c.h.b16 %v1444
        %v1497 = vunpack.c.l.b16 %v1445
        %v1498 = vunpack.c.h.b16 %v1445
        %v1499 = vunpack.c.l.b16 %v1446
        %v1500 = vunpack.c.h.b16 %v1446
        %v1501 = vunpack.c.l.b16 %v1447
        %v1502 = vunpack.c.h.b16 %v1447
        %v1503 = vunpack.c.l.b16 %v1448
        %v1504 = vunpack.c.h.b16 %v1448
        %v1505 = vunpack.c.l.b16 %v1449
        %v1506 = vunpack.c.h.b16 %v1449
        %v1507 = vunpack.c.l.b16 %v1450
        %v1508 = vunpack.c.h.b16 %v1450
        %v1509 = vunpack.c.l.b16 %v1451
        %v1510 = vunpack.c.h.b16 %v1451
        %v1511 = vunpack.c.l.b16 %v1452
        %v1512 = vunpack.c.h.b16 %v1452
        %v1513 = vpack.c.b16 %v1483, %v1481
        %v1514 = vpack.c.b16 %v1484, %v1482
        %v1515 = vpack.c.b16 %v1487, %v1485
        %v1516 = vpack.c.b16 %v1488, %v1486
        %v1517 = vpack.c.b16 %v1491, %v1489
        %v1518 = vpack.c.b16 %v1492, %v1490
        %v1519 = vpack.c.b16 %v1495, %v1493
        %v1520 = vpack.c.b16 %v1496, %v1494
        %v1521 = vpack.c.b16 %v1499, %v1497
        %v1522 = vpack.c.b16 %v1500, %v1498
        %v1523 = vpack.c.b16 %v1503, %v1501
        %v1524 = vpack.c.b16 %v1504, %v1502
        %v1525 = vpack.c.b16 %v1507, %v1505
        %v1526 = vpack.c.b16 %v1508, %v1506
        %v1527 = vpack.c.b16 %v1511, %v1509
        %v1528 = vpack.c.b16 %v1512, %v1510
        %1545 = vmatprep.subr.bf16.mxu0 %v1514
        %1546 = vmatpush1.bf16.msra.mxu0 %v1513
        %1547 = vmatprep.subr.bf16.mxu0 %v1516
        %1548 = vmatpush1.bf16.msra.mxu0 %v1515
        %1549 = vmatprep.subr.bf16.mxu0 %v1518
        %1550 = vmatpush1.bf16.msra.mxu0 %v1517
        %1551 = vmatprep.subr.bf16.mxu0 %v1520
        %1552 = vmatpush1.bf16.msra.mxu0 %v1519
        %1553 = vmatprep.subr.bf16.mxu0 %v1522
        %1554 = vmatpush1.bf16.msra.mxu0 %v1521
        %1555 = vmatprep.subr.bf16.mxu0 %v1524
        %1556 = vmatpush1.bf16.msra.mxu0 %v1523
        %1557 = vmatprep.subr.bf16.mxu0 %v1526
        %1558 = vmatpush1.bf16.msra.mxu0 %v1525
        %1559 = vmatprep.subr.bf16.mxu0 %v1528
        %1560 = vmatpush1.bf16.msra.mxu0 %v1527
        %1561 = vmatprep.subr.bf16.mxu0 0
        %1562 = vmatpush1.bf16.msra.mxu0 0
        %1563 = vmatprep.subr.bf16.mxu0 0
        %1564 = vmatpush1.bf16.msra.mxu0 0
        %1565 = vmatprep.subr.bf16.mxu0 0
        %1566 = vmatpush1.bf16.msra.mxu0 0
        %1567 = vmatprep.subr.bf16.mxu0 0
        %1568 = vmatpush1.bf16.msra.mxu0 0
        %1569 = vmatprep.subr.bf16.mxu0 0
        %1570 = vmatpush1.bf16.msra.mxu0 0
        %1571 = vmatprep.subr.bf16.mxu0 0
        %1572 = vmatpush1.bf16.msra.mxu0 0
        %1573 = vmatprep.subr.bf16.mxu0 0
        %1574 = vmatpush1.bf16.msra.mxu0 0
        %1575 = vmatprep.subr.bf16.mxu0 0
        %1576 = vmatpush1.bf16.msra.mxu0 0
        %1577 = vmatprep.mubr.bf16.mxu0 0
        %1578 = vmatmul.mubr.bf16.gmra.mrb[0].mxu0 %v1435
        %v1579 = vpop.f32.mrb[0].mxu0
        %v1580 = vadd.f32 %v1458, %v1579
        %v1581 = vpop.f32.mrb[0].mxu0
        %v1582 = vadd.f32 %v1462, %v1581
        %v1583 = vpop.f32.mrb[0].mxu0
        %v1584 = vadd.f32 %v1458, %v1583
        %v1585 = vpop.f32.mrb[0].mxu0
        %v1586 = vadd.f32 %v1462, %v1585
        %1587 = vmatprep.mubr.bf16.mxu0 0
        %1588 = vmatmul.mubr.bf16.gmra.mrb[0].mxu0 %v1436
        %v1589 = vpop.f32.mrb[0].mxu0
        %v1590 = vadd.f32 %v1458, %v1589
        %v1591 = vpop.f32.mrb[0].mxu0
        %v1592 = vadd.f32 %v1462, %v1591
        %v1593 = vpop.f32.mrb[0].mxu0
        %v1594 = vadd.f32 %v1458, %v1593
        %v1595 = vpop.f32.mrb[0].mxu0
        %v1596 = vadd.f32 %v1462, %v1595
        %1597 = vdwg.mxu0
        %v1598 = vmul.f32 %v1582, 1.442695
        %v1599 = vpow.pop %v1598
        %v1600 = vmul.f32 %v1586, 1.442695
        %v1601 = vpow.pop %v1600
        %v1602 = vmul.f32 %v1592, 1.442695
        %v1603 = vpow.pop %v1602
        %v1604 = vmul.f32 %v1596, 1.442695
        %v1605 = vpow.pop %v1604
        %v1606 = vmul.f32 %v1599, %v708
        %v1607 = vmul.f32 %v1601, %v710
        %v1608 = vmul.f32 %v1603, %v712
        %v1609 = vmul.f32 %v1605, %v714
        %v1610 = vadd.f32 %v1580, %v1606
        %v1611 = vadd.f32 %v1584, %v1607
        %v1612 = vadd.f32 %v1590, %v1608
        %v1613 = vadd.f32 %v1594, %v1609
        %v1614 = vpack.c.bf16 %v1611, %v1610
        %v1615 = vpack.c.bf16 %v1613, %v1612
        %v1616 = vld [vmem:[#allocation11] sm:$0xff]
        %v1617 = vld [vmem:[#allocation11 + $0x8] sm:$0xff]
        %v1618 = vld [vmem:[#allocation11 + $0x10] sm:$0xff]
        %v1619 = vld [vmem:[#allocation11 + $0x18] sm:$0xff]
        %v1620 = vld [vmem:[#allocation11 + $0x20] sm:$0xff]
        %v1621 = vld [vmem:[#allocation11 + $0x28] sm:$0xff]
        %v1622 = vld [vmem:[#allocation11 + $0x30] sm:$0xff]
        %v1623 = vld [vmem:[#allocation11 + $0x38] sm:$0xff]
        %v1624 = vld [vmem:[#allocation11 + $0x40] sm:$0xff]
        %v1625 = vld [vmem:[#allocation11 + $0x48] sm:$0xff]
        %v1626 = vld [vmem:[#allocation11 + $0x50] sm:$0xff]
        %v1627 = vld [vmem:[#allocation11 + $0x58] sm:$0xff]
        %v1628 = vld [vmem:[#allocation11 + $0x60] sm:$0xff]
        %v1629 = vld [vmem:[#allocation11 + $0x68] sm:$0xff]
        %v1630 = vld [vmem:[#allocation11 + $0x70] sm:$0xff]
        %v1631 = vld [vmem:[#allocation11 + $0x78] sm:$0xff]
        %v1632 = vld [vmem:[#allocation13] sm:$0xff]
        %v1633 = vld [vmem:[#allocation13 + $0x8] sm:$0xff]
        %v1634 = vld [vmem:[#allocation13 + $0x10] sm:$0xff]
        %v1635 = vld [vmem:[#allocation13 + $0x18] sm:$0xff]
        %v1636 = vld [vmem:[#allocation13 + $0x20] sm:$0xff]
        %v1637 = vld [vmem:[#allocation13 + $0x28] sm:$0xff]
        %v1638 = vld [vmem:[#allocation13 + $0x30] sm:$0xff]
        %v1639 = vld [vmem:[#allocation13 + $0x38] sm:$0xff]
        %v1640 = vld [vmem:[#allocation13 + $0x40] sm:$0xff]
        %v1641 = vld [vmem:[#allocation13 + $0x48] sm:$0xff]
        %v1642 = vld [vmem:[#allocation13 + $0x50] sm:$0xff]
        %v1643 = vld [vmem:[#allocation13 + $0x58] sm:$0xff]
        %v1644 = vld [vmem:[#allocation13 + $0x60] sm:$0xff]
        %v1645 = vld [vmem:[#allocation13 + $0x68] sm:$0xff]
        %v1646 = vld [vmem:[#allocation13 + $0x70] sm:$0xff]
        %v1647 = vld [vmem:[#allocation13 + $0x78] sm:$0xff]
        %v1664 = vunpack.c.l.b16 %v1632
        %v1665 = vunpack.c.h.b16 %v1632
        %v1666 = vunpack.c.l.b16 %v1633
        %v1667 = vunpack.c.h.b16 %v1633
        %v1668 = vunpack.c.l.b16 %v1634
        %v1669 = vunpack.c.h.b16 %v1634
        %v1670 = vunpack.c.l.b16 %v1635
        %v1671 = vunpack.c.h.b16 %v1635
        %v1672 = vunpack.c.l.b16 %v1636
        %v1673 = vunpack.c.h.b16 %v1636
        %v1674 = vunpack.c.l.b16 %v1637
        %v1675 = vunpack.c.h.b16 %v1637
        %v1676 = vunpack.c.l.b16 %v1638
        %v1677 = vunpack.c.h.b16 %v1638
        %v1678 = vunpack.c.l.b16 %v1639
        %v1679 = vunpack.c.h.b16 %v1639
        %v1680 = vunpack.c.l.b16 %v1640
        %v1681 = vunpack.c.h.b16 %v1640
        %v1682 = vunpack.c.l.b16 %v1641
        %v1683 = vunpack.c.h.b16 %v1641
        %v1684 = vunpack.c.l.b16 %v1642
        %v1685 = vunpack.c.h.b16 %v1642
        %v1686 = vunpack.c.l.b16 %v1643
        %v1687 = vunpack.c.h.b16 %v1643
        %v1688 = vunpack.c.l.b16 %v1644
        %v1689 = vunpack.c.h.b16 %v1644
        %v1690 = vunpack.c.l.b16 %v1645
        %v1691 = vunpack.c.h.b16 %v1645
        %v1692 = vunpack.c.l.b16 %v1646
        %v1693 = vunpack.c.h.b16 %v1646
        %v1694 = vunpack.c.l.b16 %v1647
        %v1695 = vunpack.c.h.b16 %v1647
        %v1696 = vpack.c.b16 %v1666, %v1664
        %v1697 = vpack.c.b16 %v1667, %v1665
        %v1698 = vpack.c.b16 %v1670, %v1668
        %v1699 = vpack.c.b16 %v1671, %v1669
        %v1700 = vpack.c.b16 %v1674, %v1672
        %v1701 = vpack.c.b16 %v1675, %v1673
        %v1702 = vpack.c.b16 %v1678, %v1676
        %v1703 = vpack.c.b16 %v1679, %v1677
        %v1704 = vpack.c.b16 %v1682, %v1680
        %v1705 = vpack.c.b16 %v1683, %v1681
        %v1706 = vpack.c.b16 %v1686, %v1684
        %v1707 = vpack.c.b16 %v1687, %v1685
        %v1708 = vpack.c.b16 %v1690, %v1688
        %v1709 = vpack.c.b16 %v1691, %v1689
        %v1710 = vpack.c.b16 %v1694, %v1692
        %v1711 = vpack.c.b16 %v1695, %v1693
        %1728 = vmatprep.subr.bf16.mxu0 %v1697
        %1729 = vmatpush1.bf16.msra.mxu0 %v1696
        %1730 = vmatprep.subr.bf16.mxu0 %v1699
        %1731 = vmatpush1.bf16.msra.mxu0 %v1698
        %1732 = vmatprep.subr.bf16.mxu0 %v1701
        %1733 = vmatpush1.bf16.msra.mxu0 %v1700
        %1734 = vmatprep.subr.bf16.mxu0 %v1703
        %1735 = vmatpush1.bf16.msra.mxu0 %v1702
        %1736 = vmatprep.subr.bf16.mxu0 %v1705
        %1737 = vmatpush1.bf16.msra.mxu0 %v1704
        %1738 = vmatprep.subr.bf16.mxu0 %v1707
        %1739 = vmatpush1.bf16.msra.mxu0 %v1706
        %1740 = vmatprep.subr.bf16.mxu0 %v1709
        %1741 = vmatpush1.bf16.msra.mxu0 %v1708
        %1742 = vmatprep.subr.bf16.mxu0 %v1711
        %1743 = vmatpush1.bf16.msra.mxu0 %v1710
        %1744 = vmatprep.subr.bf16.mxu0 0
        %1745 = vmatpush1.bf16.msra.mxu0 0
        %1746 = vmatprep.subr.bf16.mxu0 0
        %1747 = vmatpush1.bf16.msra.mxu0 0
        %1748 = vmatprep.subr.bf16.mxu0 0
        %1749 = vmatpush1.bf16.msra.mxu0 0
        %1750 = vmatprep.subr.bf16.mxu0 0
        %1751 = vmatpush1.bf16.msra.mxu0 0
        %1752 = vmatprep.subr.bf16.mxu0 0
        %1753 = vmatpush1.bf16.msra.mxu0 0
        %1754 = vmatprep.subr.bf16.mxu0 0
        %1755 = vmatpush1.bf16.msra.mxu0 0
        %1756 = vmatprep.subr.bf16.mxu0 0
        %1757 = vmatpush1.bf16.msra.mxu0 0
        %1758 = vmatprep.subr.bf16.mxu0 0
        %1759 = vmatpush1.bf16.msra.mxu0 0
        %1760 = vmatprep.mubr.bf16.mxu0 0
        %1761 = vmatmul.mubr.bf16.gmra.mrb[0].mxu0 %v1091
        %v1762 = vpop.f32.mrb[0].mxu0
        %v1763 = vadd.f32 0.0, %v1762
        %v1764 = vpop.f32.mrb[0].mxu0
        %v1765 = vadd.f32 0.0, %v1764
        %v1766 = vpop.f32.mrb[0].mxu0
        %v1767 = vadd.f32 0.0, %v1766
        %v1768 = vpop.f32.mrb[0].mxu0
        %v1769 = vadd.f32 0.0, %v1768
        %1770 = vmatprep.mubr.bf16.mxu0 0
        %1771 = vmatmul.mubr.bf16.gmra.mrb[0].mxu0 %v1092
        %v1772 = vpop.f32.mrb[0].mxu0
        %v1773 = vadd.f32 0.0, %v1772
        %v1774 = vpop.f32.mrb[0].mxu0
        %v1775 = vadd.f32 0.0, %v1774
        %v1776 = vpop.f32.mrb[0].mxu0
        %v1777 = vadd.f32 0.0, %v1776
        %v1778 = vpop.f32.mrb[0].mxu0
        %v1779 = vadd.f32 0.0, %v1778
        %1780 = vdwg.mxu0
        %v1797 = vunpack.c.l.b16 %v1616
        %v1798 = vunpack.c.h.b16 %v1616
        %v1799 = vunpack.c.l.b16 %v1617
        %v1800 = vunpack.c.h.b16 %v1617
        %v1801 = vunpack.c.l.b16 %v1618
        %v1802 = vunpack.c.h.b16 %v1618
        %v1803 = vunpack.c.l.b16 %v1619
        %v1804 = vunpack.c.h.b16 %v1619
        %v1805 = vunpack.c.l.b16 %v1620
        %v1806 = vunpack.c.h.b16 %v1620
        %v1807 = vunpack.c.l.b16 %v1621
        %v1808 = vunpack.c.h.b16 %v1621
        %v1809 = vunpack.c.l.b16 %v1622
        %v1810 = vunpack.c.h.b16 %v1622
        %v1811 = vunpack.c.l.b16 %v1623
        %v1812 = vunpack.c.h.b16 %v1623
        %v1813 = vunpack.c.l.b16 %v1624
        %v1814 = vunpack.c.h.b16 %v1624
        %v1815 = vunpack.c.l.b16 %v1625
        %v1816 = vunpack.c.h.b16 %v1625
        %v1817 = vunpack.c.l.b16 %v1626
        %v1818 = vunpack.c.h.b16 %v1626
        %v1819 = vunpack.c.l.b16 %v1627
        %v1820 = vunpack.c.h.b16 %v1627
        %v1821 = vunpack.c.l.b16 %v1628
        %v1822 = vunpack.c.h.b16 %v1628
        %v1823 = vunpack.c.l.b16 %v1629
        %v1824 = vunpack.c.h.b16 %v1629
        %v1825 = vunpack.c.l.b16 %v1630
        %v1826 = vunpack.c.h.b16 %v1630
        %v1827 = vunpack.c.l.b16 %v1631
        %v1828 = vunpack.c.h.b16 %v1631
        %v1829 = vpack.c.b16 %v1799, %v1797
        %v1830 = vpack.c.b16 %v1800, %v1798
        %v1831 = vpack.c.b16 %v1803, %v1801
        %v1832 = vpack.c.b16 %v1804, %v1802
        %v1833 = vpack.c.b16 %v1807, %v1805
        %v1834 = vpack.c.b16 %v1808, %v1806
        %v1835 = vpack.c.b16 %v1811, %v1809
        %v1836 = vpack.c.b16 %v1812, %v1810
        %v1837 = vpack.c.b16 %v1815, %v1813
        %v1838 = vpack.c.b16 %v1816, %v1814
        %v1839 = vpack.c.b16 %v1819, %v1817
        %v1840 = vpack.c.b16 %v1820, %v1818
        %v1841 = vpack.c.b16 %v1823, %v1821
        %v1842 = vpack.c.b16 %v1824, %v1822
        %v1843 = vpack.c.b16 %v1827, %v1825
        %v1844 = vpack.c.b16 %v1828, %v1826
        %1861 = vmatprep.subr.bf16.mxu0 %v1830
        %1862 = vmatpush1.bf16.msra.mxu0 %v1829
        %1863 = vmatprep.subr.bf16.mxu0 %v1832
        %1864 = vmatpush1.bf16.msra.mxu0 %v1831
        %1865 = vmatprep.subr.bf16.mxu0 %v1834
        %1866 = vmatpush1.bf16.msra.mxu0 %v1833
        %1867 = vmatprep.subr.bf16.mxu0 %v1836
        %1868 = vmatpush1.bf16.msra.mxu0 %v1835
        %1869 = vmatprep.subr.bf16.mxu0 %v1838
        %1870 = vmatpush1.bf16.msra.mxu0 %v1837
        %1871 = vmatprep.subr.bf16.mxu0 %v1840
        %1872 = vmatpush1.bf16.msra.mxu0 %v1839
        %1873 = vmatprep.subr.bf16.mxu0 %v1842
        %1874 = vmatpush1.bf16.msra.mxu0 %v1841
        %1875 = vmatprep.subr.bf16.mxu0 %v1844
        %1876 = vmatpush1.bf16.msra.mxu0 %v1843
        %1877 = vmatprep.subr.bf16.mxu0 0
        %1878 = vmatpush1.bf16.msra.mxu0 0
        %1879 = vmatprep.subr.bf16.mxu0 0
        %1880 = vmatpush1.bf16.msra.mxu0 0
        %1881 = vmatprep.subr.bf16.mxu0 0
        %1882 = vmatpush1.bf16.msra.mxu0 0
        %1883 = vmatprep.subr.bf16.mxu0 0
        %1884 = vmatpush1.bf16.msra.mxu0 0
        %1885 = vmatprep.subr.bf16.mxu0 0
        %1886 = vmatpush1.bf16.msra.mxu0 0
        %1887 = vmatprep.subr.bf16.mxu0 0
        %1888 = vmatpush1.bf16.msra.mxu0 0
        %1889 = vmatprep.subr.bf16.mxu0 0
        %1890 = vmatpush1.bf16.msra.mxu0 0
        %1891 = vmatprep.subr.bf16.mxu0 0
        %1892 = vmatpush1.bf16.msra.mxu0 0
        %1893 = vmatprep.mubr.bf16.mxu0 0
        %1894 = vmatmul.mubr.bf16.gmra.mrb[0].mxu0 %v1614
        %v1895 = vpop.f32.mrb[0].mxu0
        %v1896 = vadd.f32 %v1763, %v1895
        %v1897 = vpop.f32.mrb[0].mxu0
        %v1898 = vadd.f32 %v1765, %v1897
        %v1899 = vpop.f32.mrb[0].mxu0
        %v1900 = vadd.f32 %v1767, %v1899
        %v1901 = vpop.f32.mrb[0].mxu0
        %v1902 = vadd.f32 %v1769, %v1901
        %1903 = vmatprep.mubr.bf16.mxu0 0
        %1904 = vmatmul.mubr.bf16.gmra.mrb[0].mxu0 %v1615
        %v1905 = vpop.f32.mrb[0].mxu0
        %v1906 = vadd.f32 %v1773, %v1905
        %v1907 = vpop.f32.mrb[0].mxu0
        %v1908 = vadd.f32 %v1775, %v1907
        %v1909 = vpop.f32.mrb[0].mxu0
        %v1910 = vadd.f32 %v1777, %v1909
        %v1911 = vpop.f32.mrb[0].mxu0
        %v1912 = vadd.f32 %v1779, %v1911
        %1913 = vdwg.mxu0
        %v1914 = vld [vmem:[%s13] sm:$0x3]
        %v1916 = vlaneseq
        %v1917 = vshrl.u32 %v1916, 7
        %v1918 = vsub.s32 0, %v1917
        %v1919 = vrot.slane %v1914, %v1918
        %v1920 = vlaneseq
        %v1921 = vshrl.u32 %v1920, 7
        %v1922 = vsub.s32 1, %v1921
        %v1923 = vrot.slane %v1914, %v1922
        %v1926 = vadd.f32 %v1896, %v1919
        %v1927 = vadd.f32 %v1898, %v1923
        %v1928 = vadd.f32 %v1900, %v1919
        %v1929 = vadd.f32 %v1902, %v1923
        %v1930 = vadd.f32 %v1906, %v1919
        %v1931 = vadd.f32 %v1908, %v1923
        %v1932 = vadd.f32 %v1910, %v1919
        %v1933 = vadd.f32 %v1912, %v1923
        %v1934 = vtanh.pop %v1926
        %v1935 = vtanh.pop %v1927
        %v1936 = vtanh.pop %v1928
        %v1937 = vtanh.pop %v1929
        %v1938 = vtanh.pop %v1930
        %v1939 = vtanh.pop %v1931
        %v1940 = vtanh.pop %v1932
        %v1941 = vtanh.pop %v1933
        %v1942 = vpack.c.bf16 %v1936, %v1934
        %v1943 = vpack.c.bf16 %v1937, %v1935
        %v1944 = vpack.c.bf16 %v1940, %v1938
        %v1945 = vpack.c.bf16 %v1941, %v1939
        %v1946 = vld [vmem:[%s14] sm:$0xff]
        %v1947 = vld [vmem:[%s14 + $0x8] sm:$0xff]
        %v1948 = vld [vmem:[%s14 + $0x10] sm:$0xff]
        %v1949 = vld [vmem:[%s14 + $0x18] sm:$0xff]
        %v1950 = vld [vmem:[%s14 + $0x20] sm:$0xff]
        %v1951 = vld [vmem:[%s14 + $0x28] sm:$0xff]
        %v1952 = vld [vmem:[%s14 + $0x30] sm:$0xff]
        %v1953 = vld [vmem:[%s14 + $0x38] sm:$0xff]
        %v1954 = vld [vmem:[%s14 + $0x40] sm:$0xff]
        %v1955 = vld [vmem:[%s14 + $0x48] sm:$0xff]
        %v1956 = vld [vmem:[%s14 + $0x50] sm:$0xff]
        %v1957 = vld [vmem:[%s14 + $0x58] sm:$0xff]
        %v1958 = vld [vmem:[%s14 + $0x60] sm:$0xff]
        %v1959 = vld [vmem:[%s14 + $0x68] sm:$0xff]
        %v1960 = vld [vmem:[%s14 + $0x70] sm:$0xff]
        %v1961 = vld [vmem:[%s14 + $0x78] sm:$0xff]
        %v1962 = vld [vmem:[%s14 + $0x80] sm:$0xff]
        %v1963 = vld [vmem:[%s14 + $0x88] sm:$0xff]
        %v1964 = vld [vmem:[%s14 + $0x90] sm:$0xff]
        %v1965 = vld [vmem:[%s14 + $0x98] sm:$0xff]
        %v1966 = vld [vmem:[%s14 + $0xa0] sm:$0xff]
        %v1967 = vld [vmem:[%s14 + $0xa8] sm:$0xff]
        %v1968 = vld [vmem:[%s14 + $0xb0] sm:$0xff]
        %v1969 = vld [vmem:[%s14 + $0xb8] sm:$0xff]
        %v1970 = vld [vmem:[%s14 + $0xc0] sm:$0xff]
        %v1971 = vld [vmem:[%s14 + $0xc8] sm:$0xff]
        %v1972 = vld [vmem:[%s14 + $0xd0] sm:$0xff]
        %v1973 = vld [vmem:[%s14 + $0xd8] sm:$0xff]
        %v1974 = vld [vmem:[%s14 + $0xe0] sm:$0xff]
        %v1975 = vld [vmem:[%s14 + $0xe8] sm:$0xff]
        %v1976 = vld [vmem:[%s14 + $0xf0] sm:$0xff]
        %v1977 = vld [vmem:[%s14 + $0xf8] sm:$0xff]
        %v1978 = vld [vmem:[%s15] sm:$0x3]
        %v1980 = vlaneseq
        %v1981 = vshrl.u32 %v1980, 7
        %v1982 = vsub.s32 0, %v1981
        %v1983 = vrot.slane %v1978, %v1982
        %v1984 = vlaneseq
        %v1985 = vshrl.u32 %v1984, 7
        %v1986 = vsub.s32 1, %v1985
        %v1987 = vrot.slane %v1978, %v1986
        %v2022 = vunpack.c.l.b16 %v1946
        %v2023 = vunpack.c.h.b16 %v1946
        %v2024 = vunpack.c.l.b16 %v1947
        %v2025 = vunpack.c.h.b16 %v1947
        %v2026 = vunpack.c.l.b16 %v1948
        %v2027 = vunpack.c.h.b16 %v1948
        %v2028 = vunpack.c.l.b16 %v1949
        %v2029 = vunpack.c.h.b16 %v1949
        %v2030 = vunpack.c.l.b16 %v1950
        %v2031 = vunpack.c.h.b16 %v1950
        %v2032 = vunpack.c.l.b16 %v1951
        %v2033 = vunpack.c.h.b16 %v1951
        %v2034 = vunpack.c.l.b16 %v1952
        %v2035 = vunpack.c.h.b16 %v1952
        %v2036 = vunpack.c.l.b16 %v1953
        %v2037 = vunpack.c.h.b16 %v1953
        %v2038 = vunpack.c.l.b16 %v1954
        %v2039 = vunpack.c.h.b16 %v1954
        %v2040 = vunpack.c.l.b16 %v1955
        %v2041 = vunpack.c.h.b16 %v1955
        %v2042 = vunpack.c.l.b16 %v1956
        %v2043 = vunpack.c.h.b16 %v1956
        %v2044 = vunpack.c.l.b16 %v1957
        %v2045 = vunpack.c.h.b16 %v1957
        %v2046 = vunpack.c.l.b16 %v1958
        %v2047 = vunpack.c.h.b16 %v1958
        %v2048 = vunpack.c.l.b16 %v1959
        %v2049 = vunpack.c.h.b16 %v1959
        %v2050 = vunpack.c.l.b16 %v1960
        %v2051 = vunpack.c.h.b16 %v1960
        %v2052 = vunpack.c.l.b16 %v1961
        %v2053 = vunpack.c.h.b16 %v1961
        %v2054 = vunpack.c.l.b16 %v1962
        %v2055 = vunpack.c.h.b16 %v1962
        %v2056 = vunpack.c.l.b16 %v1963
        %v2057 = vunpack.c.h.b16 %v1963
        %v2058 = vunpack.c.l.b16 %v1964
        %v2059 = vunpack.c.h.b16 %v1964
        %v2060 = vunpack.c.l.b16 %v1965
        %v2061 = vunpack.c.h.b16 %v1965
        %v2062 = vunpack.c.l.b16 %v1966
        %v2063 = vunpack.c.h.b16 %v1966
        %v2064 = vunpack.c.l.b16 %v1967
        %v2065 = vunpack.c.h.b16 %v1967
        %v2066 = vunpack.c.l.b16 %v1968
        %v2067 = vunpack.c.h.b16 %v1968
        %v2068 = vunpack.c.l.b16 %v1969
        %v2069 = vunpack.c.h.b16 %v1969
        %v2070 = vunpack.c.l.b16 %v1970
        %v2071 = vunpack.c.h.b16 %v1970
        %v2072 = vunpack.c.l.b16 %v1971
        %v2073 = vunpack.c.h.b16 %v1971
        %v2074 = vunpack.c.l.b16 %v1972
        %v2075 = vunpack.c.h.b16 %v1972
        %v2076 = vunpack.c.l.b16 %v1973
        %v2077 = vunpack.c.h.b16 %v1973
        %v2078 = vunpack.c.l.b16 %v1974
        %v2079 = vunpack.c.h.b16 %v1974
        %v2080 = vunpack.c.l.b16 %v1975
        %v2081 = vunpack.c.h.b16 %v1975
        %v2082 = vunpack.c.l.b16 %v1976
        %v2083 = vunpack.c.h.b16 %v1976
        %v2084 = vunpack.c.l.b16 %v1977
        %v2085 = vunpack.c.h.b16 %v1977
        %v2086 = vpack.c.b16 %v2024, %v2022
        %v2087 = vpack.c.b16 %v2025, %v2023
        %v2088 = vpack.c.b16 %v2028, %v2026
        %v2089 = vpack.c.b16 %v2029, %v2027
        %v2090 = vpack.c.b16 %v2032, %v2030
        %v2091 = vpack.c.b16 %v2033, %v2031
        %v2092 = vpack.c.b16 %v2036, %v2034
        %v2093 = vpack.c.b16 %v2037, %v2035
        %v2094 = vpack.c.b16 %v2040, %v2038
        %v2095 = vpack.c.b16 %v2041, %v2039
        %v2096 = vpack.c.b16 %v2044, %v2042
        %v2097 = vpack.c.b16 %v2045, %v2043
        %v2098 = vpack.c.b16 %v2048, %v2046
        %v2099 = vpack.c.b16 %v2049, %v2047
        %v2100 = vpack.c.b16 %v2052, %v2050
        %v2101 = vpack.c.b16 %v2053, %v2051
        %v2102 = vpack.c.b16 %v2056, %v2054
        %v2103 = vpack.c.b16 %v2057, %v2055
        %v2104 = vpack.c.b16 %v2060, %v2058
        %v2105 = vpack.c.b16 %v2061, %v2059
        %v2106 = vpack.c.b16 %v2064, %v2062
        %v2107 = vpack.c.b16 %v2065, %v2063
        %v2108 = vpack.c.b16 %v2068, %v2066
        %v2109 = vpack.c.b16 %v2069, %v2067
        %v2110 = vpack.c.b16 %v2072, %v2070
        %v2111 = vpack.c.b16 %v2073, %v2071
        %v2112 = vpack.c.b16 %v2076, %v2074
        %v2113 = vpack.c.b16 %v2077, %v2075
        %v2114 = vpack.c.b16 %v2080, %v2078
        %v2115 = vpack.c.b16 %v2081, %v2079
        %v2116 = vpack.c.b16 %v2084, %v2082
        %v2117 = vpack.c.b16 %v2085, %v2083
        %2150 = vmatprep.subr.bf16.mxu0 %v2087
        %2151 = vmatpush1.bf16.msra.mxu0 %v2086
        %2152 = vmatprep.subr.bf16.mxu0 %v2089
        %2153 = vmatpush1.bf16.msra.mxu0 %v2088
        %2154 = vmatprep.subr.bf16.mxu0 %v2091
        %2155 = vmatpush1.bf16.msra.mxu0 %v2090
        %2156 = vmatprep.subr.bf16.mxu0 %v2093
        %2157 = vmatpush1.bf16.msra.mxu0 %v2092
        %2158 = vmatprep.subr.bf16.mxu0 %v2095
        %2159 = vmatpush1.bf16.msra.mxu0 %v2094
        %2160 = vmatprep.subr.bf16.mxu0 %v2097
        %2161 = vmatpush1.bf16.msra.mxu0 %v2096
        %2162 = vmatprep.subr.bf16.mxu0 %v2099
        %2163 = vmatpush1.bf16.msra.mxu0 %v2098
        %2164 = vmatprep.subr.bf16.mxu0 %v2101
        %2165 = vmatpush1.bf16.msra.mxu0 %v2100
        %2166 = vmatprep.subr.bf16.mxu0 %v2103
        %2167 = vmatpush1.bf16.msra.mxu0 %v2102
        %2168 = vmatprep.subr.bf16.mxu0 %v2105
        %2169 = vmatpush1.bf16.msra.mxu0 %v2104
        %2170 = vmatprep.subr.bf16.mxu0 %v2107
        %2171 = vmatpush1.bf16.msra.mxu0 %v2106
        %2172 = vmatprep.subr.bf16.mxu0 %v2109
        %2173 = vmatpush1.bf16.msra.mxu0 %v2108
        %2174 = vmatprep.subr.bf16.mxu0 %v2111
        %2175 = vmatpush1.bf16.msra.mxu0 %v2110
        %2176 = vmatprep.subr.bf16.mxu0 %v2113
        %2177 = vmatpush1.bf16.msra.mxu0 %v2112
        %2178 = vmatprep.subr.bf16.mxu0 %v2115
        %2179 = vmatpush1.bf16.msra.mxu0 %v2114
        %2180 = vmatprep.subr.bf16.mxu0 %v2117
        %2181 = vmatpush1.bf16.msra.mxu0 %v2116
        %2182 = vmatprep.mubr.bf16.mxu0 %v1943
        %2183 = vmatmul.mubr.bf16.gmra.mrb[0].mxu0 %v1942
        %v2184 = vpop.f32.mrb[0].mxu0
        %v2185 = vadd.f32 %v1983, %v2184
        %v2186 = vpop.f32.mrb[0].mxu0
        %v2187 = vadd.f32 %v1987, %v2186
        %v2188 = vpop.f32.mrb[0].mxu0
        %v2189 = vadd.f32 %v1983, %v2188
        %v2190 = vpop.f32.mrb[0].mxu0
        %v2191 = vadd.f32 %v1987, %v2190
        %2192 = vmatprep.mubr.bf16.mxu0 %v1945
        %2193 = vmatmul.mubr.bf16.gmra.mrb[0].mxu0 %v1944
        %v2194 = vpop.f32.mrb[0].mxu0
        %v2195 = vadd.f32 %v1983, %v2194
        %v2196 = vpop.f32.mrb[0].mxu0
        %v2197 = vadd.f32 %v1987, %v2196
        %v2198 = vpop.f32.mrb[0].mxu0
        %v2199 = vadd.f32 %v1983, %v2198
        %v2200 = vpop.f32.mrb[0].mxu0
        %v2201 = vadd.f32 %v1987, %v2200
        %2202 = vdwg.mxu0
        %v2203 = vtanh.pop %v2185
        %v2204 = vtanh.pop %v2187
        %v2205 = vtanh.pop %v2189
        %v2206 = vtanh.pop %v2191
        %v2207 = vtanh.pop %v2195
        %v2208 = vtanh.pop %v2197
        %v2209 = vtanh.pop %v2199
        %v2210 = vtanh.pop %v2201
        %v2211 = vpack.c.bf16 %v2205, %v2203
        %v2212 = vpack.c.bf16 %v2206, %v2204
        %v2213 = vpack.c.bf16 %v2209, %v2207
        %v2214 = vpack.c.bf16 %v2210, %v2208
        %v2215 = vld [vmem:[%s16] sm:$0xff]
        %v2216 = vld [vmem:[%s16 + $0x8] sm:$0xff]
        %v2217 = vld [vmem:[%s16 + $0x10] sm:$0xff]
        %v2218 = vld [vmem:[%s16 + $0x18] sm:$0xff]
        %v2219 = vld [vmem:[%s16 + $0x20] sm:$0xff]
        %v2220 = vld [vmem:[%s16 + $0x28] sm:$0xff]
        %v2221 = vld [vmem:[%s16 + $0x30] sm:$0xff]
        %v2222 = vld [vmem:[%s16 + $0x38] sm:$0xff]
        %v2223 = vld [vmem:[%s16 + $0x40] sm:$0xff]
        %v2224 = vld [vmem:[%s16 + $0x48] sm:$0xff]
        %v2225 = vld [vmem:[%s16 + $0x50] sm:$0xff]
        %v2226 = vld [vmem:[%s16 + $0x58] sm:$0xff]
        %v2227 = vld [vmem:[%s16 + $0x60] sm:$0xff]
        %v2228 = vld [vmem:[%s16 + $0x68] sm:$0xff]
        %v2229 = vld [vmem:[%s16 + $0x70] sm:$0xff]
        %v2230 = vld [vmem:[%s16 + $0x78] sm:$0xff]
        %v2231 = vld [vmem:[%s16 + $0x80] sm:$0xff]
        %v2232 = vld [vmem:[%s16 + $0x88] sm:$0xff]
        %v2233 = vld [vmem:[%s16 + $0x90] sm:$0xff]
        %v2234 = vld [vmem:[%s16 + $0x98] sm:$0xff]
        %v2235 = vld [vmem:[%s16 + $0xa0] sm:$0xff]
        %v2236 = vld [vmem:[%s16 + $0xa8] sm:$0xff]
        %v2237 = vld [vmem:[%s16 + $0xb0] sm:$0xff]
        %v2238 = vld [vmem:[%s16 + $0xb8] sm:$0xff]
        %v2239 = vld [vmem:[%s16 + $0xc0] sm:$0xff]
        %v2240 = vld [vmem:[%s16 + $0xc8] sm:$0xff]
        %v2241 = vld [vmem:[%s16 + $0xd0] sm:$0xff]
        %v2242 = vld [vmem:[%s16 + $0xd8] sm:$0xff]
        %v2243 = vld [vmem:[%s16 + $0xe0] sm:$0xff]
        %v2244 = vld [vmem:[%s16 + $0xe8] sm:$0xff]
        %v2245 = vld [vmem:[%s16 + $0xf0] sm:$0xff]
        %v2246 = vld [vmem:[%s16 + $0xf8] sm:$0xff]
        %v2247 = vld [vmem:[%s17] sm:$0x3]
        %v2249 = vlaneseq
        %v2250 = vshrl.u32 %v2249, 7
        %v2251 = vsub.s32 0, %v2250
        %v2252 = vrot.slane %v2247, %v2251
        %v2253 = vlaneseq
        %v2254 = vshrl.u32 %v2253, 7
        %v2255 = vsub.s32 1, %v2254
        %v2256 = vrot.slane %v2247, %v2255
        %v2291 = vunpack.c.l.b16 %v2215
        %v2292 = vunpack.c.h.b16 %v2215
        %v2293 = vunpack.c.l.b16 %v2216
        %v2294 = vunpack.c.h.b16 %v2216
        %v2295 = vunpack.c.l.b16 %v2217
        %v2296 = vunpack.c.h.b16 %v2217
        %v2297 = vunpack.c.l.b16 %v2218
        %v2298 = vunpack.c.h.b16 %v2218
        %v2299 = vunpack.c.l.b16 %v2219
        %v2300 = vunpack.c.h.b16 %v2219
        %v2301 = vunpack.c.l.b16 %v2220
        %v2302 = vunpack.c.h.b16 %v2220
        %v2303 = vunpack.c.l.b16 %v2221
        %v2304 = vunpack.c.h.b16 %v2221
        %v2305 = vunpack.c.l.b16 %v2222
        %v2306 = vunpack.c.h.b16 %v2222
        %v2307 = vunpack.c.l.b16 %v2223
        %v2308 = vunpack.c.h.b16 %v2223
        %v2309 = vunpack.c.l.b16 %v2224
        %v2310 = vunpack.c.h.b16 %v2224
        %v2311 = vunpack.c.l.b16 %v2225
        %v2312 = vunpack.c.h.b16 %v2225
        %v2313 = vunpack.c.l.b16 %v2226
        %v2314 = vunpack.c.h.b16 %v2226
        %v2315 = vunpack.c.l.b16 %v2227
        %v2316 = vunpack.c.h.b16 %v2227
        %v2317 = vunpack.c.l.b16 %v2228
        %v2318 = vunpack.c.h.b16 %v2228
        %v2319 = vunpack.c.l.b16 %v2229
        %v2320 = vunpack.c.h.b16 %v2229
        %v2321 = vunpack.c.l.b16 %v2230
        %v2322 = vunpack.c.h.b16 %v2230
        %v2323 = vunpack.c.l.b16 %v2231
        %v2324 = vunpack.c.h.b16 %v2231
        %v2325 = vunpack.c.l.b16 %v2232
        %v2326 = vunpack.c.h.b16 %v2232
        %v2327 = vunpack.c.l.b16 %v2233
        %v2328 = vunpack.c.h.b16 %v2233
        %v2329 = vunpack.c.l.b16 %v2234
        %v2330 = vunpack.c.h.b16 %v2234
        %v2331 = vunpack.c.l.b16 %v2235
        %v2332 = vunpack.c.h.b16 %v2235
        %v2333 = vunpack.c.l.b16 %v2236
        %v2334 = vunpack.c.h.b16 %v2236
        %v2335 = vunpack.c.l.b16 %v2237
        %v2336 = vunpack.c.h.b16 %v2237
        %v2337 = vunpack.c.l.b16 %v2238
        %v2338 = vunpack.c.h.b16 %v2238
        %v2339 = vunpack.c.l.b16 %v2239
        %v2340 = vunpack.c.h.b16 %v2239
        %v2341 = vunpack.c.l.b16 %v2240
        %v2342 = vunpack.c.h.b16 %v2240
        %v2343 = vunpack.c.l.b16 %v2241
        %v2344 = vunpack.c.h.b16 %v2241
        %v2345 = vunpack.c.l.b16 %v2242
        %v2346 = vunpack.c.h.b16 %v2242
        %v2347 = vunpack.c.l.b16 %v2243
        %v2348 = vunpack.c.h.b16 %v2243
        %v2349 = vunpack.c.l.b16 %v2244
        %v2350 = vunpack.c.h.b16 %v2244
        %v2351 = vunpack.c.l.b16 %v2245
        %v2352 = vunpack.c.h.b16 %v2245
        %v2353 = vunpack.c.l.b16 %v2246
        %v2354 = vunpack.c.h.b16 %v2246
        %v2355 = vpack.c.b16 %v2293, %v2291
        %v2356 = vpack.c.b16 %v2294, %v2292
        %v2357 = vpack.c.b16 %v2297, %v2295
        %v2358 = vpack.c.b16 %v2298, %v2296
        %v2359 = vpack.c.b16 %v2301, %v2299
        %v2360 = vpack.c.b16 %v2302, %v2300
        %v2361 = vpack.c.b16 %v2305, %v2303
        %v2362 = vpack.c.b16 %v2306, %v2304
        %v2363 = vpack.c.b16 %v2309, %v2307
        %v2364 = vpack.c.b16 %v2310, %v2308
        %v2365 = vpack.c.b16 %v2313, %v2311
        %v2366 = vpack.c.b16 %v2314, %v2312
        %v2367 = vpack.c.b16 %v2317, %v2315
        %v2368 = vpack.c.b16 %v2318, %v2316
        %v2369 = vpack.c.b16 %v2321, %v2319
        %v2370 = vpack.c.b16 %v2322, %v2320
        %v2371 = vpack.c.b16 %v2325, %v2323
        %v2372 = vpack.c.b16 %v2326, %v2324
        %v2373 = vpack.c.b16 %v2329, %v2327
        %v2374 = vpack.c.b16 %v2330, %v2328
        %v2375 = vpack.c.b16 %v2333, %v2331
        %v2376 = vpack.c.b16 %v2334, %v2332
        %v2377 = vpack.c.b16 %v2337, %v2335
        %v2378 = vpack.c.b16 %v2338, %v2336
        %v2379 = vpack.c.b16 %v2341, %v2339
        %v2380 = vpack.c.b16 %v2342, %v2340
        %v2381 = vpack.c.b16 %v2345, %v2343
        %v2382 = vpack.c.b16 %v2346, %v2344
        %v2383 = vpack.c.b16 %v2349, %v2347
        %v2384 = vpack.c.b16 %v2350, %v2348
        %v2385 = vpack.c.b16 %v2353, %v2351
        %v2386 = vpack.c.b16 %v2354, %v2352
        %2419 = vmatprep.subr.bf16.mxu0 %v2356
        %2420 = vmatpush1.bf16.msra.mxu0 %v2355
        %2421 = vmatprep.subr.bf16.mxu0 %v2358
        %2422 = vmatpush1.bf16.msra.mxu0 %v2357
        %2423 = vmatprep.subr.bf16.mxu0 %v2360
        %2424 = vmatpush1.bf16.msra.mxu0 %v2359
        %2425 = vmatprep.subr.bf16.mxu0 %v2362
        %2426 = vmatpush1.bf16.msra.mxu0 %v2361
        %2427 = vmatprep.subr.bf16.mxu0 %v2364
        %2428 = vmatpush1.bf16.msra.mxu0 %v2363
        %2429 = vmatprep.subr.bf16.mxu0 %v2366
        %2430 = vmatpush1.bf16.msra.mxu0 %v2365
        %2431 = vmatprep.subr.bf16.mxu0 %v2368
        %2432 = vmatpush1.bf16.msra.mxu0 %v2367
        %2433 = vmatprep.subr.bf16.mxu0 %v2370
        %2434 = vmatpush1.bf16.msra.mxu0 %v2369
        %2435 = vmatprep.subr.bf16.mxu0 %v2372
        %2436 = vmatpush1.bf16.msra.mxu0 %v2371
        %2437 = vmatprep.subr.bf16.mxu0 %v2374
        %2438 = vmatpush1.bf16.msra.mxu0 %v2373
        %2439 = vmatprep.subr.bf16.mxu0 %v2376
        %2440 = vmatpush1.bf16.msra.mxu0 %v2375
        %2441 = vmatprep.subr.bf16.mxu0 %v2378
        %2442 = vmatpush1.bf16.msra.mxu0 %v2377
        %2443 = vmatprep.subr.bf16.mxu0 %v2380
        %2444 = vmatpush1.bf16.msra.mxu0 %v2379
        %2445 = vmatprep.subr.bf16.mxu0 %v2382
        %2446 = vmatpush1.bf16.msra.mxu0 %v2381
        %2447 = vmatprep.subr.bf16.mxu0 %v2384
        %2448 = vmatpush1.bf16.msra.mxu0 %v2383
        %2449 = vmatprep.subr.bf16.mxu0 %v2386
        %2450 = vmatpush1.bf16.msra.mxu0 %v2385
        %2451 = vmatprep.mubr.bf16.mxu0 %v2212
        %2452 = vmatmul.mubr.bf16.gmra.mrb[0].mxu0 %v2211
        %v2453 = vpop.f32.mrb[0].mxu0
        %v2454 = vadd.f32 %v2252, %v2453
        %v2455 = vpop.f32.mrb[0].mxu0
        %v2456 = vadd.f32 %v2256, %v2455
        %v2457 = vpop.f32.mrb[0].mxu0
        %v2458 = vadd.f32 %v2252, %v2457
        %v2459 = vpop.f32.mrb[0].mxu0
        %v2460 = vadd.f32 %v2256, %v2459
        %2461 = vmatprep.mubr.bf16.mxu0 %v2214
        %2462 = vmatmul.mubr.bf16.gmra.mrb[0].mxu0 %v2213
        %v2463 = vpop.f32.mrb[0].mxu0
        %v2464 = vadd.f32 %v2252, %v2463
        %v2465 = vpop.f32.mrb[0].mxu0
        %v2466 = vadd.f32 %v2256, %v2465
        %v2467 = vpop.f32.mrb[0].mxu0
        %v2468 = vadd.f32 %v2252, %v2467
        %v2469 = vpop.f32.mrb[0].mxu0
        %v2470 = vadd.f32 %v2256, %v2469
        %2471 = vdwg.mxu0
        %v2472 = vmul.f32 %v2454, 0.5
        %v2473 = vmul.f32 %v2456, 0.5
        %v2474 = vmul.f32 %v2458, 0.5
        %v2475 = vmul.f32 %v2460, 0.5
        %v2476 = vmul.f32 %v2464, 0.5
        %v2477 = vmul.f32 %v2466, 0.5
        %v2478 = vmul.f32 %v2468, 0.5
        %v2479 = vmul.f32 %v2470, 0.5
        %v2480 = vtanh.pop %v2472
        %v2481 = vtanh.pop %v2473
        %v2482 = vtanh.pop %v2474
        %v2483 = vtanh.pop %v2475
        %v2484 = vtanh.pop %v2476
        %v2485 = vtanh.pop %v2477
        %v2486 = vtanh.pop %v2478
        %v2487 = vtanh.pop %v2479
        %v2488 = vadd.f32 %v2480, 1.0
        %v2489 = vadd.f32 %v2481, 1.0
        %v2490 = vadd.f32 %v2482, 1.0
        %v2491 = vadd.f32 %v2483, 1.0
        %v2492 = vadd.f32 %v2484, 1.0
        %v2493 = vadd.f32 %v2485, 1.0
        %v2494 = vadd.f32 %v2486, 1.0
        %v2495 = vadd.f32 %v2487, 1.0
        %v2496 = vmul.f32 %v2488, 0.5
        %v2497 = vmul.f32 %v2489, 0.5
        %v2498 = vmul.f32 %v2490, 0.5
        %v2499 = vmul.f32 %v2491, 0.5
        %v2500 = vmul.f32 %v2492, 0.5
        %v2501 = vmul.f32 %v2493, 0.5
        %v2502 = vmul.f32 %v2494, 0.5
        %v2503 = vmul.f32 %v2495, 0.5
        %2504 = vst [vmem:[%s687] sm:$0xff] %v2496
        %2505 = vst [vmem:[%s687 + $0x8] sm:$0xff] %v2497
        %2506 = vst [vmem:[%s687 + $0x10] sm:$0xff] %v2498
        %2507 = vst [vmem:[%s687 + $0x18] sm:$0xff] %v2499
        %2508 = vst [vmem:[%s687 + $0x20] sm:$0xff] %v2500
        %2509 = vst [vmem:[%s687 + $0x28] sm:$0xff] %v2501
        %2510 = vst [vmem:[%s687 + $0x30] sm:$0xff] %v2502
        %2511 = vst [vmem:[%s687 + $0x38] sm:$0xff] %v2503
        %s2512 = sand.u32 %s432, 1
        %s2513 = scalar_lea.sflag [#allocation4], %s2512
        %s2514 = sand.u32 %s432, 1
        %s2515 = smul.addr %s2514, 64
        %s2516 = scalar_lea.vmem [#allocation14], %s2515
        // Predicated region
        $region121: #{tdvae_reconstruct.1} parent=91 // pred_check
          %p2517 = pneg %p442
        $region122: #{tdvae_reconstruct.1} parent=91 // pred_check_branch
          %2519 = sbr.rel (%p2517) target = $region124
        $region123: #{tdvae_reconstruct.1} parent=91 // pred_region
          %s2520 = smul.u32 4, %s36
          %s2522 = ssub.s32 1024, 1024
          %2523 = vsyncadd %s2513, %s2522
          %s2524 = smul.addr %s2520, 2
          %s2525 = smul.addr %s2524, 128
          %s2526 = scalar_lea.hbm %s18, %s2525
          %s2527 = sshll.u32 %s2516, 4
          %s2528 = int_to_ptr.vmem [resolvable:$true] %s2527
          %2533 = dma.vmem_to_hbm [thread:$0]  %s2528, 1024, %s2526, %s2513, 256, 256, 16
        $region124: #{tdvae_reconstruct.1} parent=91 // pred_fallthru
          _
      $region92: #{tdvae_reconstruct.1} parent=5 // pred_fallthru
        _
      %p2534 = scmp.le.s32.totalorder 2, %s31
      // Predicated region
      $region125: #{tdvae_reconstruct.1} parent=5 // pred_check
        %p2535 = pneg %p2534
      $region126: #{tdvae_reconstruct.1} parent=5 // pred_check_branch
        %2537 = sbr.rel (%p2535) target = $region128
      $region127: #{tdvae_reconstruct.1} parent=5 // pred_region
        %s2538 = ssub.s32 %s31, 2
        // Predicated region
        $region129: #{tdvae_reconstruct.1} parent=127 // pred_check
          %p2539 = pneg %p448
        $region130: #{tdvae_reconstruct.1} parent=127 // pred_check_branch
          %2541 = sbr.rel (%p2539) target = $region132
        $region131: #{tdvae_reconstruct.1} parent=127 // pred_region
          %s2542 = sand.u32 %s433, 1
          %s2543 = scalar_lea.sflag [#allocation4], %s2542
          %s2544 = sand.u32 %s433, 1
          %s2545 = smul.addr %s2544, 64
          %s2546 = scalar_lea.vmem [#allocation14], %s2545
          %2547 = dma.done %s2543, 1024
        $region132: #{tdvae_reconstruct.1} parent=127 // pred_fallthru
          _
      $region128: #{tdvae_reconstruct.1} parent=5 // pred_fallthru
        _
    $region6: #{tdvae_reconstruct.1} parent=1 // loop_footer
      %s35 = sadd.s32 1, %s31
    $region7: #{tdvae_reconstruct.1} parent=1 // loop_footer_branch
      %30 = sbr.rel target = $region3
    $region8: #{tdvae_reconstruct.1} parent=1 // loop_exit
      _
    %2548 = vsyncpa [#allocation3], 1
    %s2549 = scalar_lea.sflag [#allocation3], 1
    %2550 = vsyncpa %s2549, 1
    %2551 = vsyncpa [#allocation6], 1
    %2552 = vsyncpa [#allocation9], 1
    %2553 = vsyncpa [#allocation12], 1
    %2554 = vsyncpa [#allocation4], 1
    %s2555 = scalar_lea.sflag [#allocation4], 1
    %2556 = vsyncpa %s2555, 1

</llo_original>
